<compile_context>
chip_gen: v6e
topology: v6e:2x2x1
jax: 0.10.0
libtpu: 0.0.40
codegen_flags: <defaults>
</compile_context>

<pallas_src>
import functools
import math

import jax
import jax.numpy as jnp
from jax.experimental import pallas as pl
from jax.experimental.pallas import tpu as pltpu


def _round_up(v, m):
    return m * ((v + m - 1) // m)


def _vmem_budget_bytes():
    """Generation-aware VMEM budget (v7x: 64 MiB/TC, v5e/v6e: 128 MiB)."""
    cap = 64 * 1024 * 1024  # conservative default = v7x per-TC capacity
    try:
        info = pltpu.get_tpu_info()
        v = getattr(info, "vmem_capacity_bytes", None)
        if v:
            cap = int(v)
    except Exception:
        pass
    # Leave headroom for Mosaic internal scratch / pipelining slack.
    return int(cap * 0.85)


def _plan(n, f_in, f_out, budget):
    """Pick (n_pad, tile_dst, tile_src, x_resident) for the given VMEM budget."""
    # 256-aligned padding: native for the 2x256x256 MXU on v6e/v7x and still a
    # 128-multiple for v5e's 4x128x128 MXU.
    n_pad = _round_up(n, 256)

    def fits(tile_dst, tile_src, resident):
        x_src_bytes = (2 * n_pad * f_in * 2) if resident else (2 * tile_src * f_in * 2)
        usage = (
            2 * tile_dst * tile_src * 1        # adj int8, double-buffered
            + tile_dst * tile_src * 2          # in-kernel bf16 adj temp
            + x_src_bytes                      # src-side features
            + 2 * tile_dst * f_in * 2          # dst-side features (self term)
            + 2 * 2 * f_in * f_out * 2         # w1 + w2
            + 2 * tile_dst * f_out * 4         # output block
            + tile_dst * f_in * 4              # agg scratch
            + tile_dst * 4                     # degree scratch
            + 2 * 1024 * 1024                  # slack for other temps
        )
        return usage <= budget

    # dst tile: >=512 fills the MXU on v6e/v7x, but keep >=2 dst tiles so the
    # "parallel" axis can feed both v7x TensorCores.
    tile_dst = 512
    while tile_dst > 128 and (n_pad % tile_dst != 0 or n_pad // tile_dst < 2):
        tile_dst //= 2
    tile_dst = max(tile_dst, 128)

    # src tile: as large as fits, to amortize the per-grid-step overhead.
    tile_src = 128
    for cand in (2048, 1024, 512, 256, 128):
        if cand <= n_pad and n_pad % cand == 0 and fits(tile_dst, cand, False):
            tile_src = cand
            break

    # Keep x fully VMEM-resident when it fits: collapses the per-dst-tile
    # re-stream of features (N^2*F_in*2/tile_dst bytes) to a single HBM pass.
    x_resident = fits(tile_dst, tile_src, True)
    return n_pad, tile_dst, tile_src, x_resident


def _sage_kernel(adj_ref, x_src_ref, x_dst_ref, w1_ref, w2_ref, b_ref,
                 out_ref, agg_ref, deg_ref, *, x_resident, tile_src):
    """One (dst_tile, src_tile) grid step of the GraphSAGE forward.

    adj_ref  : (TD, TS)          int8  adjacency adj[dst, src]
    x_src_ref: (N_pad or TS, F_in) bf16 source-node features
    x_dst_ref: (TD, F_in)        bf16  destination-node features (self term)
    w1_ref   : (F_in, F_out)     bf16
    w2_ref   : (F_in, F_out)     bf16
    b_ref    : (1, F_out)        f32   combined bias b1 + b2
    out_ref  : (TD, F_out)       f32   resident across the src axis
    agg_ref  : (TD, F_in)        f32   scratch: sum_j adj[i, j] * x[j]
    deg_ref  : (TD, 1)           f32   scratch: in-degree
    """
    j = pl.program_id(1)

    @pl.when(j == 0)
    def _prologue():
        agg_ref[...] = jnp.zeros_like(agg_ref)
        deg_ref[...] = jnp.zeros_like(deg_ref)
        # Aggregation-independent self term; overlaps the src adjacency stream
        # instead of stacking serially behind the last adj DMA.
        out_ref[...] = (jnp.dot(x_dst_ref[...], w1_ref[...],
                                preferred_element_type=jnp.float32)
                        + b_ref[...])

    # Single cast of the adjacency tile; feeds both the degree reduce and the
    # MXU matmul (no separate f32 materialization of the tile).
    adj_bf = adj_ref[...].astype(jnp.bfloat16)                 # (TD, TS)

    # in-degree partial sum with forced f32 accumulation (tile_src can be >256).
    deg_ref[...] += jnp.sum(adj_bf, axis=-1, keepdims=True, dtype=jnp.float32)

    if x_resident:
        src0 = pl.multiple_of(j * tile_src, tile_src)
        x_blk = x_src_ref[pl.ds(src0, tile_src), :]            # slice resident x
    else:
        x_blk = x_src_ref[...]                                 # streamed tile

    # neighbor aggregation on the MXU: agg += adj @ x_src (bf16 in, f32 acc)
    agg_ref[...] += jnp.dot(adj_bf, x_blk, preferred_element_type=jnp.float32)

    @pl.when(j == pl.num_programs(1) - 1)
    def _finalize():
        deg = deg_ref[...]
        # Degrees are small exact integers -> exact reciprocal is essentially free.
        inv = jnp.where(deg > 0.0, 1.0 / deg, 0.0)
        ah = (agg_ref[...] * inv).astype(jnp.bfloat16)         # (TD, F_in)
        out_ref[...] += jnp.dot(ah, w2_ref[...],
                                preferred_element_type=jnp.float32)


def graphsage_forward(x, adj, w1, b1, w2, b2):
    """GraphSAGE eval forward (use_pp=False).

    x  : (N, F_in) float           node features
    adj: (N, N)    int8/bool       dense adjacency mask adj[dst, src]
    w1, w2: (F_in, F_out)          transposed nn.Linear weights
    b1, b2: (F_out,)
    """
    n, f_in = x.shape
    f_out = w1.shape[1]

    budget = _vmem_budget_bytes()
    n_pad, tile_dst, tile_src, x_resident = _plan(n, f_in, f_out, budget)

    # Adjacency should arrive as int8/bool upstream; an f32->int8 conversion
    # here would cost an extra ~5*N^2-byte HBM pass before the kernel runs.
    if adj.dtype != jnp.int8:
        adj = adj.astype(jnp.int8)
    adj_p = jnp.pad(adj, ((0, n_pad - n), (0, n_pad - n)))

    # Pad features once; the same padded array feeds both the src-side
    # aggregation stream and the dst-side self term.
    x_p = jnp.pad(x.astype(jnp.bfloat16), ((0, n_pad - n), (0, 0)))

    w1_bf = w1.astype(jnp.bfloat16)
    w2_bf = w2.astype(jnp.bfloat16)
    bias = (b1 + b2).reshape(1, f_out).astype(jnp.float32)

    grid = (n_pad // tile_dst, n_pad // tile_src)

    if x_resident:
        x_src_spec = pl.BlockSpec((n_pad, f_in), lambda i, j: (0, 0))
    else:
        x_src_spec = pl.BlockSpec((tile_src, f_in), lambda i, j: (j, 0))

    kernel = functools.partial(_sage_kernel, x_resident=x_resident,
                               tile_src=tile_src)

    flops = 2.0 * n_pad * n_pad * f_in + 4.0 * n_pad * f_in * f_out
    x_bytes = (n_pad * f_in * 2 * (1 if x_resident else grid[0])  # src stream
               + n_pad * f_in * 2)                                # dst pass
    bytes_accessed = (n_pad * n_pad                               # int8 adjacency
                      + x_bytes
                      + 2 * f_in * f_out * 2 + f_out * 4
                      + n_pad * f_out * 4)

    out = pl.pallas_call(
        kernel,
        out_shape=jax.ShapeDtypeStruct((n_pad, f_out), jnp.float32),
        grid_spec=pltpu.PrefetchScalarGridSpec(
            num_scalar_prefetch=0,
            grid=grid,
            in_specs=[
                pl.BlockSpec((tile_dst, tile_src), lambda i, j: (i, j)),  # adj
                x_src_spec,                                               # x (src)
                pl.BlockSpec((tile_dst, f_in), lambda i, j: (i, 0)),      # x (dst)
                pl.BlockSpec((f_in, f_out), lambda i, j: (0, 0)),         # w1
                pl.BlockSpec((f_in, f_out), lambda i, j: (0, 0)),         # w2
                pl.BlockSpec((1, f_out), lambda i, j: (0, 0)),            # b1+b2
            ],
            out_specs=pl.BlockSpec((tile_dst, f_out), lambda i, j: (i, 0)),
            scratch_shapes=[
                pltpu.VMEM((tile_dst, f_in), jnp.float32),   # agg accumulator
                pltpu.VMEM((tile_dst, 1), jnp.float32),      # degree accumulator
            ],
        ),
        compiler_params=pltpu.CompilerParams(
            dimension_semantics=("parallel", "arbitrary"),
            vmem_limit_bytes=budget,
        ),
        cost_estimate=pl.CostEstimate(
            flops=int(flops),
            transcendentals=int(n_pad),
            bytes_accessed=int(bytes_accessed),
        ),
    )(adj_p, x_p, x_p, w1_bf, w2_bf, bias)

    return out[:n]


def graphsage_reference(x, adj, w1, b1, w2, b2):
    """Pure-JAX reference of the eval-mode, use_pp=False GraphSAGE forward."""
    deg = jnp.sum(adj, axis=1, keepdims=True)
    ah = jnp.where(deg > 0, (adj @ x) / jnp.maximum(deg, 1.0), 0.0)
    return x @ w1 + b1 + ah @ w2 + b2


if __name__ == "__main__":
    # Small problem: 200 nodes (exercises padding to 256 and a 2-tile dst grid),
    # 128-d input/output features.
    N, F_IN, F_OUT = 200, 128, 128

    key = jax.random.PRNGKey(0)
    k_x, k_adj, k_w1, k_b1, k_w2, k_b2 = jax.random.split(key, 6)

    x = jax.random.normal(k_x, (N, F_IN), dtype=jnp.float32)

    # torch nn.Linear(in, out): weight is (out, in); we store its transpose.
    stdv = 1.0 / math.sqrt(F_IN)
    w1 = jax.random.uniform(k_w1, (F_IN, F_OUT), minval=-stdv, maxval=stdv,
                            dtype=jnp.float32)
    b1 = jax.random.uniform(k_b1, (F_OUT,), minval=-stdv, maxval=stdv,
                            dtype=jnp.float32)
    w2 = jax.random.uniform(k_w2, (F_IN, F_OUT), minval=-stdv, maxval=stdv,
                            dtype=jnp.float32)
    b2 = jax.random.uniform(k_b2, (F_OUT,), minval=-stdv, maxval=stdv,
                            dtype=jnp.float32)

    # Dense adjacency mask adj[dst, src], built directly as int8 (no wrapper
    # f32->int8 HBM pass); self-loops keep every in-degree >= 1.
    rand = jax.random.uniform(k_adj, (N, N))
    adj_i8 = jnp.logical_or(rand < 0.05, jnp.eye(N, dtype=bool)).astype(jnp.int8)

    out = graphsage_forward(x, adj_i8, w1, b1, w2, b2)
    out = jax.block_until_ready(out)

    ref = graphsage_reference(x, adj_i8.astype(jnp.float32), w1, b1, w2, b2)
    assert out.shape == (N, F_OUT)
    max_err = float(jnp.max(jnp.abs(out - ref)))
    # bf16 matmul inputs -> looser tolerance than pure f32.
    assert jnp.allclose(out, ref, atol=2e-2, rtol=2e-2), (
        f"mismatch vs reference, max abs err {max_err}")

    print("KERNEL_OK")
</pallas_src>

<mosaic_0001>
module attributes {stable_mosaic.version = 11 : i64} {
  func.func @_sage_kernel(%arg0: i32, %arg1: i32, %arg2: memref<128x256xi8, #tpu.memory_space<vmem>>, %arg3: memref<256x128xbf16, #tpu.memory_space<vmem>>, %arg4: memref<128x128xbf16, #tpu.memory_space<vmem>>, %arg5: memref<128x128xbf16, #tpu.memory_space<vmem>>, %arg6: memref<128x128xbf16, #tpu.memory_space<vmem>>, %arg7: memref<1x128xf32, #tpu.memory_space<vmem>>, %arg8: memref<128x128xf32, #tpu.memory_space<vmem>>, %arg9: memref<128x128xf32, #tpu.memory_space<vmem>>, %arg10: memref<128x1xf32, #tpu.memory_space<vmem>>) attributes {dimension_semantics = [#tpu.dimension_semantics<parallel>, #tpu.dimension_semantics<arbitrary>], iteration_bounds = array<i64: 2, 1>, scalar_prefetch = 0 : i64, scratch_operands = 2 : i64, tpu.core_type = #tpu.core_type<tc>, window_params = [{transform_indices = @transform_0, window_bounds = array<i64: 128, 256>}, {pipeline_mode = #tpu.pipeline_mode<synchronous>, transform_indices = @transform_1, window_bounds = array<i64: 256, 128>}, {transform_indices = @transform_2, window_bounds = array<i64: 128, 128>}, {pipeline_mode = #tpu.pipeline_mode<synchronous>, transform_indices = @transform_3, window_bounds = array<i64: 128, 128>}, {pipeline_mode = #tpu.pipeline_mode<synchronous>, transform_indices = @transform_4, window_bounds = array<i64: 128, 128>}, {pipeline_mode = #tpu.pipeline_mode<synchronous>, transform_indices = @transform_5, window_bounds = array<i64: 1, 128>}, {transform_indices = @transform_6, window_bounds = array<i64: 128, 128>}]} {
    %c0_i32 = arith.constant 0 : i32
    %0 = arith.cmpi eq, %arg1, %c0_i32 : i32
    %1 = arith.extui %0 : i1 to i32
    %c0_i32_0 = arith.constant 0 : i32
    %2 = arith.cmpi ne, %1, %c0_i32_0 : i32
    scf.if %2 {
      %cst_14 = arith.constant 0.000000e+00 : f32
      %22 = vector.broadcast %cst_14 : f32 to vector<128x128xf32>
      %c0_15 = arith.constant 0 : index
      %c0_16 = arith.constant 0 : index
      %23 = vector.load %arg9[%c0_15, %c0_16] : memref<128x128xf32, #tpu.memory_space<vmem>>, vector<128x128xf32>
      tpu.vector_store %arg9[%c0_15, %c0_16], %22 {strides = array<i32>} : memref<128x128xf32, #tpu.memory_space<vmem>>, vector<128x128xf32>,
      %cst_17 = arith.constant 0.000000e+00 : f32
      %24 = vector.broadcast %cst_17 : f32 to vector<128x1xf32>
      %c0_18 = arith.constant 0 : index
      %c0_19 = arith.constant 0 : index
      %25 = vector.load %arg10[%c0_18, %c0_19] : memref<128x1xf32, #tpu.memory_space<vmem>>, vector<128x1xf32>
      tpu.vector_store %arg10[%c0_18, %c0_19], %24 {strides = array<i32>} : memref<128x1xf32, #tpu.memory_space<vmem>>, vector<128x1xf32>,
      %c0_20 = arith.constant 0 : index
      %c0_21 = arith.constant 0 : index
      %26 = vector.load %arg4[%c0_20, %c0_21] : memref<128x128xbf16, #tpu.memory_space<vmem>>, vector<128x128xbf16>
      %c0_22 = arith.constant 0 : index
      %c0_23 = arith.constant 0 : index
      %27 = vector.load %arg5[%c0_22, %c0_23] : memref<128x128xbf16, #tpu.memory_space<vmem>>, vector<128x128xbf16>
      %cst_24 = arith.constant dense<0.000000e+00> : vector<128x128xf32>
      %28 = tpu.matmul %26, %27, %cst_24 {dimension_numbers = #tpu.dot_dimension_numbers<[1], [0], [0], [1], [0, 0, 1, 1], [], []>} : vector<128x128xbf16>, vector<128x128xbf16>, vector<128x128xf32> -> vector<128x128xf32>
      %c0_25 = arith.constant 0 : index
      %c0_26 = arith.constant 0 : index
      %29 = vector.load %arg7[%c0_25, %c0_26] : memref<1x128xf32, #tpu.memory_space<vmem>>, vector<1x128xf32>
      %30 = vector.broadcast %29 : vector<1x128xf32> to vector<128x128xf32>
      %31 = arith.addf %28, %30 : vector<128x128xf32>
      %c0_27 = arith.constant 0 : index
      %c0_28 = arith.constant 0 : index
      %32 = vector.load %arg8[%c0_27, %c0_28] : memref<128x128xf32, #tpu.memory_space<vmem>>, vector<128x128xf32>
      tpu.vector_store %arg8[%c0_27, %c0_28], %31 {strides = array<i32>} : memref<128x128xf32, #tpu.memory_space<vmem>>, vector<128x128xf32>,
    } else {
    }
    %c0 = arith.constant 0 : index
    %c0_1 = arith.constant 0 : index
    %3 = vector.load %arg2[%c0, %c0_1] : memref<128x256xi8, #tpu.memory_space<vmem>>, vector<128x256xi8>
    %4 = arith.sitofp %3 : vector<128x256xi8> to vector<128x256xbf16>
    %c0_2 = arith.constant 0 : index
    %c0_3 = arith.constant 0 : index
    %5 = vector.load %arg10[%c0_2, %c0_3] : memref<128x1xf32, #tpu.memory_space<vmem>>, vector<128x1xf32>
    %6 = arith.extf %4 : vector<128x256xbf16> to vector<128x256xf32>
    %cst = arith.constant dense<0.000000e+00> : vector<128xf32>
    %7 = vector.multi_reduction <add>, %6, %cst [1] : vector<128x256xf32> to vector<128xf32>
    %8 = vector.shape_cast %7 : vector<128xf32> to vector<128x1xf32>
    %9 = arith.addf %5, %8 : vector<128x1xf32>
    %c0_4 = arith.constant 0 : index
    %c0_5 = arith.constant 0 : index
    %10 = vector.load %arg10[%c0_4, %c0_5] : memref<128x1xf32, #tpu.memory_space<vmem>>, vector<128x1xf32>
    tpu.vector_store %arg10[%c0_4, %c0_5], %9 {strides = array<i32>} : memref<128x1xf32, #tpu.memory_space<vmem>>, vector<128x1xf32>,
    %c256_i32 = arith.constant 256 : i32
    %11 = arith.muli %arg1, %c256_i32 : i32
    %12 = tpu.assume_multiple %11, 256 : i32
    %13 = arith.index_cast %12 : i32 to index
    %c0_6 = arith.constant 0 : index
    %14 = vector.load %arg3[%13, %c0_6] : memref<256x128xbf16, #tpu.memory_space<vmem>>, vector<256x128xbf16>
    %c0_7 = arith.constant 0 : index
    %c0_8 = arith.constant 0 : index
    %15 = vector.load %arg9[%c0_7, %c0_8] : memref<128x128xf32, #tpu.memory_space<vmem>>, vector<128x128xf32>
    %cst_9 = arith.constant dense<0.000000e+00> : vector<128x128xf32>
    %16 = tpu.matmul %4, %14, %cst_9 {dimension_numbers = #tpu.dot_dimension_numbers<[1], [0], [0], [1], [0, 0, 1, 1], [], []>} : vector<128x256xbf16>, vector<256x128xbf16>, vector<128x128xf32> -> vector<128x128xf32>
    %17 = arith.addf %15, %16 : vector<128x128xf32>
    %c0_10 = arith.constant 0 : index
    %c0_11 = arith.constant 0 : index
    %18 = vector.load %arg9[%c0_10, %c0_11] : memref<128x128xf32, #tpu.memory_space<vmem>>, vector<128x128xf32>
    tpu.vector_store %arg9[%c0_10, %c0_11], %17 {strides = array<i32>} : memref<128x128xf32, #tpu.memory_space<vmem>>, vector<128x128xf32>,
    %c0_i32_12 = arith.constant 0 : i32
    %19 = arith.cmpi eq, %arg1, %c0_i32_12 : i32
    %20 = arith.extui %19 : i1 to i32
    %c0_i32_13 = arith.constant 0 : i32
    %21 = arith.cmpi ne, %20, %c0_i32_13 : i32
    scf.if %21 {
      %c0_14 = arith.constant 0 : index
      %c0_15 = arith.constant 0 : index
      %22 = vector.load %arg10[%c0_14, %c0_15] : memref<128x1xf32, #tpu.memory_space<vmem>>, vector<128x1xf32>
      %cst_16 = arith.constant 0.000000e+00 : f32
      %23 = vector.broadcast %cst_16 : f32 to vector<128x1xf32>
      %24 = arith.cmpf ogt, %22, %23 : vector<128x1xf32>
      %cst_17 = arith.constant 1.000000e+00 : f32
      %25 = vector.broadcast %cst_17 : f32 to vector<128x1xf32>
      %26 = arith.divf %25, %22 : vector<128x1xf32>
      %cst_18 = arith.constant 0.000000e+00 : f32
      %27 = vector.broadcast %cst_18 : f32 to vector<128x1xf32>
      %28 = arith.select %24, %26, %27 : vector<128x1xi1>, vector<128x1xf32>
      %c0_19 = arith.constant 0 : index
      %c0_20 = arith.constant 0 : index
      %29 = vector.load %arg9[%c0_19, %c0_20] : memref<128x128xf32, #tpu.memory_space<vmem>>, vector<128x128xf32>
      %30 = vector.broadcast %28 : vector<128x1xf32> to vector<128x128xf32>
      %31 = arith.mulf %29, %30 : vector<128x128xf32>
      %32 = arith.truncf %31 : vector<128x128xf32> to vector<128x128xbf16>
      %c0_21 = arith.constant 0 : index
      %c0_22 = arith.constant 0 : index
      %33 = vector.load %arg8[%c0_21, %c0_22] : memref<128x128xf32, #tpu.memory_space<vmem>>, vector<128x128xf32>
      %c0_23 = arith.constant 0 : index
      %c0_24 = arith.constant 0 : index
      %34 = vector.load %arg6[%c0_23, %c0_24] : memref<128x128xbf16, #tpu.memory_space<vmem>>, vector<128x128xbf16>
      %cst_25 = arith.constant dense<0.000000e+00> : vector<128x128xf32>
      %35 = tpu.matmul %32, %34, %cst_25 {dimension_numbers = #tpu.dot_dimension_numbers<[1], [0], [0], [1], [0, 0, 1, 1], [], []>} : vector<128x128xbf16>, vector<128x128xbf16>, vector<128x128xf32> -> vector<128x128xf32>
      %36 = arith.addf %33, %35 : vector<128x128xf32>
      %c0_26 = arith.constant 0 : index
      %c0_27 = arith.constant 0 : index
      %37 = vector.load %arg8[%c0_26, %c0_27] : memref<128x128xf32, #tpu.memory_space<vmem>>, vector<128x128xf32>
      tpu.vector_store %arg8[%c0_26, %c0_27], %36 {strides = array<i32>} : memref<128x128xf32, #tpu.memory_space<vmem>>, vector<128x128xf32>,
    } else {
    }
    return
  }
  func.func @transform_0(%arg0: i32, %arg1: i32) -> (i32, i32) {
    %c0_i32 = arith.constant 0 : i32
    return %arg0, %arg1 : i32, i32
  }
  func.func @transform_1(%arg0: i32, %arg1: i32) -> (i32, i32) {
    %c0_i32 = arith.constant 0 : i32
    %c0_i32_0 = arith.constant 0 : i32
    %c0_i32_1 = arith.constant 0 : i32
    return %c0_i32, %c0_i32_0 : i32, i32
  }
  func.func @transform_2(%arg0: i32, %arg1: i32) -> (i32, i32) {
    %c0_i32 = arith.constant 0 : i32
    %c0_i32_0 = arith.constant 0 : i32
    return %arg0, %c0_i32 : i32, i32
  }
  func.func @transform_3(%arg0: i32, %arg1: i32) -> (i32, i32) {
    %c0_i32 = arith.constant 0 : i32
    %c0_i32_0 = arith.constant 0 : i32
    %c0_i32_1 = arith.constant 0 : i32
    return %c0_i32, %c0_i32_0 : i32, i32
  }
  func.func @transform_4(%arg0: i32, %arg1: i32) -> (i32, i32) {
    %c0_i32 = arith.constant 0 : i32
    %c0_i32_0 = arith.constant 0 : i32
    %c0_i32_1 = arith.constant 0 : i32
    return %c0_i32, %c0_i32_0 : i32, i32
  }
  func.func @transform_5(%arg0: i32, %arg1: i32) -> (i32, i32) {
    %c0_i32 = arith.constant 0 : i32
    %c0_i32_0 = arith.constant 0 : i32
    %c0_i32_1 = arith.constant 0 : i32
    return %c0_i32, %c0_i32_0 : i32, i32
  }
  func.func @transform_6(%arg0: i32, %arg1: i32) -> (i32, i32) {
    %c0_i32 = arith.constant 0 : i32
    %c0_i32_0 = arith.constant 0 : i32
    return %arg0, %c0_i32 : i32, i32
  }
}

</mosaic_0001>

<llo_original>
// kernel: tpu_custom_call.1
$region0: #{tpu_custom_call.1}
  #allocation0 [shape = 'u32[]', space=smem, size = 0x4, offset = 0x4, fixed_abs, tag = 'smem constant byte address 0x4 - core index']
  #allocation1 [shape = 'u32[144,128]{1,0:T(1,128)}', space=vmem, size = 0x12000, scoped, tag = 'internal scratch']
  #allocation2 [shape = 'f32[128,128]{1,0:T(8,128)}', space=vmem, size = 0x10000, scoped, tag = 'scratch operand']
  #allocation3 [shape = 'f32[128,1]{1,0:T(8,128)}', space=vmem, size = 0x10000, scoped, tag = 'scratch operand']
  %s0 = inlined_call_operand.hbm [shape: s8[256,256], index: 0, kind: input, shape index: {}]
  %s1 = inlined_call_operand.hbm [shape: bf16[256,128], index: 1, kind: input, shape index: {}]
  %s2 = inlined_call_operand.hbm [shape: bf16[256,128], index: 2, kind: input, shape index: {}]
  %s3 = inlined_call_operand.hbm [shape: bf16[128,128], index: 3, kind: input, shape index: {}]
  %s4 = inlined_call_operand.hbm [shape: bf16[128,128], index: 4, kind: input, shape index: {}]
  %s5 = inlined_call_operand.vmem [shape: f32[1,128], index: 5, kind: input, shape index: {}]
  %s6 = inlined_call_operand.hbm [shape: f32[256,128], index: 6, kind: output, shape index: {}]
  %s7 = sld [smem:[#allocation0]]
  $region85: #{tpu_custom_call.1} parent=0
    _
  %s9 = ssub.s32 1, %s7
  %s10 = scalar_select 0, %s9, %s7
  $region1: #{tpu_custom_call.1} parent=0
    #allocation4 [shape = 'u8[65536]{0}', space=vmem, size = 0x10000, scoped, tag = 'input window, operand 0']
    #allocation5 [shape = 's32[2]{0}', space=sflag, size = 0x8, scoped, tag = 'scoped memory for tpu_custom_call.1']
    #allocation6 [shape = 's32[2]{0}', space=sflag, size = 0x8, scoped, tag = 'scoped memory for tpu_custom_call.1']
    #allocation7 [shape = 'u8[65536]{0}', space=vmem, size = 0x10000, scoped, tag = 'input window, operand 1, single buffered']
    #allocation8 [shape = 's32[1]{0}', space=sflag, size = 0x4, scoped, tag = 'scoped memory for tpu_custom_call.1']
    #allocation9 [shape = 'u8[65536]{0}', space=vmem, size = 0x10000, scoped, tag = 'input window, operand 2']
    #allocation10 [shape = 'u8[32768]{0}', space=vmem, size = 0x8000, scoped, tag = 'input window, operand 3, single buffered']
    #allocation11 [shape = 'u8[32768]{0}', space=vmem, size = 0x8000, scoped, tag = 'input window, operand 4, single buffered']
    #allocation12 [shape = 's32[1]{0}', space=sflag, size = 0x4, scoped, tag = 'scoped memory for tpu_custom_call.1']
    #allocation13 [shape = 'u8[131072]{0}', space=vmem, size = 0x20000, scoped, tag = 'output window, operand 0']
    %11 = vsyncpa [#allocation5], 0
    %s12 = scalar_lea.sflag [#allocation5], 1
    %13 = vsyncpa %s12, 0
    %14 = vsyncpa [#allocation8], 0
    %15 = vsyncpa [#allocation12], 0
    %16 = vsyncpa [#allocation6], 0
    %s17 = scalar_lea.sflag [#allocation6], 1
    %18 = vsyncpa %s17, 0
    loop: start=0, step=1, limit=4
    $region2: #{tpu_custom_call.1} parent=1 // loop_pre_header
      _
    $region3: #{tpu_custom_call.1} parent=1 // loop_header
      %s20 = sphi 0, %s24
      %p21 = scmp.ge.s32.totalorder %s20, 4
      %s27 = sphi 0, %s39
      %s28 = sphi 0, %s35
      %s29 = sphi 0, %s27
      %s30 = sphi 0, %s28
      %s31 = sphi 0, %s29
      %s32 = sphi 0, %s30
      %s44 = sphi 0, %s46
      %s47 = sphi 0, %s44
      %s48 = sphi 0, %s47
      %s64 = sphi 0, %s48
      %s68 = sphi 0, %s68
      %s70 = sphi 0, %s68
      %s71 = sphi 0, %s70
      %s85 = sphi 0, %s71
      %s91 = sphi 0, %s93
      %s94 = sphi 0, %s91
      %s95 = sphi 0, %s94
      %s111 = sphi 0, %s95
      %s115 = sphi 0, %s115
      %s117 = sphi 0, %s115
      %s118 = sphi 0, %s117
      %s132 = sphi 0, %s118
      %s136 = sphi 0, %s136
      %s138 = sphi 0, %s136
      %s139 = sphi 0, %s138
      %s153 = sphi 0, %s139
      %s157 = sphi 0, %s157
      %s159 = sphi 0, %s157
      %s160 = sphi 0, %s159
      %s174 = sphi 0, %s160
      %s180 = sphi 0, %s182
      %s183 = sphi 0, %s180
      %s184 = sphi 0, %s183
      %s200 = sphi 0, %s184
    $region4: #{tpu_custom_call.1} parent=1 // loop_header_branch
      %23 = sbr.rel (%p21) target = $region8
    $region5: #{tpu_custom_call.1} parent=1 // loop_body
      %s25 = ssub.s32 %s20, 1
      %s26 = ssub.s32 %s20, 2
      %s33 = sadd.s32 1, %s28
      %p34 = scmp.ge.s32.totalorder %s33, 1
      %s35 = scalar_select %p34, 0, %s33
      %s36 = sadd.s32 1, %s27
      %s37 = scalar_select %p34, %s36, %s27
      %p38 = scmp.ge.s32.totalorder %s37, 2
      %s39 = scalar_select %p38, 0, %s37
      %s40 = ssub.s32 %s27, %s39
      %s41 = ssub.s32 %s28, %s35
      %s42 = sor.u32 %s40, %s41
      %p43 = scmp.eq.s32.totalorder %s42, 0
      %s45 = sadd.s32 %s44, 1
      %s46 = scalar_select %p43, %s44, %s45
      %p49 = pneg %p43
      %p50 = scmp.eq.s32.totalorder %s20, 1
      %p51 = por %p49, %p50
      %p52 = scmp.ne.s32.totalorder %s44, %s47
      %p53 = scmp.eq.s32.totalorder %s20, 0
      %p54 = por %p52, %p53
      %p55 = scmp.ne.s32.totalorder %s44, %s47
      %p56 = scmp.eq.s32.totalorder %s25, 1
      %p57 = por %p55, %p56
      %p58 = scmp.ne.s32.totalorder %s47, %s48
      %p59 = scmp.eq.s32.totalorder %s25, 0
      %p60 = por %p58, %p59
      %p61 = scmp.ne.s32.totalorder %s47, %s48
      %p62 = scmp.eq.s32.totalorder %s26, 1
      %p63 = por %p61, %p62
      %p65 = scmp.ne.s32.totalorder %s48, %s64
      %p66 = scmp.eq.s32.totalorder %s26, 0
      %p67 = por %p65, %p66
      %s69 = sadd.s32 %s68, 1
      %p72 = scmp.eq.s32.totalorder %s20, 1
      %p73 = scmp.ne.s32.totalorder %s68, %s70
      %p74 = scmp.eq.s32.totalorder %s20, 0
      %p75 = por %p73, %p74
      %p76 = scmp.ne.s32.totalorder %s68, %s70
      %p77 = scmp.eq.s32.totalorder %s25, 1
      %p78 = por %p76, %p77
      %p79 = scmp.ne.s32.totalorder %s70, %s71
      %p80 = scmp.eq.s32.totalorder %s25, 0
      %p81 = por %p79, %p80
      %p82 = scmp.ne.s32.totalorder %s70, %s71
      %p83 = scmp.eq.s32.totalorder %s26, 1
      %p84 = por %p82, %p83
      %p86 = scmp.ne.s32.totalorder %s71, %s85
      %p87 = scmp.eq.s32.totalorder %s26, 0
      %p88 = por %p86, %p87
      %s89 = ssub.s32 %s27, %s39
      %p90 = scmp.eq.s32.totalorder %s89, 0
      %s92 = sadd.s32 %s91, 1
      %s93 = scalar_select %p90, %s91, %s92
      %p96 = pneg %p90
      %p97 = scmp.eq.s32.totalorder %s20, 1
      %p98 = por %p96, %p97
      %p99 = scmp.ne.s32.totalorder %s91, %s94
      %p100 = scmp.eq.s32.totalorder %s20, 0
      %p101 = por %p99, %p100
      %p102 = scmp.ne.s32.totalorder %s91, %s94
      %p103 = scmp.eq.s32.totalorder %s25, 1
      %p104 = por %p102, %p103
      %p105 = scmp.ne.s32.totalorder %s94, %s95
      %p106 = scmp.eq.s32.totalorder %s25, 0
      %p107 = por %p105, %p106
      %p108 = scmp.ne.s32.totalorder %s94, %s95
      %p109 = scmp.eq.s32.totalorder %s26, 1
      %p110 = por %p108, %p109
      %p112 = scmp.ne.s32.totalorder %s95, %s111
      %p113 = scmp.eq.s32.totalorder %s26, 0
      %p114 = por %p112, %p113
      %s116 = sadd.s32 %s115, 1
      %p119 = scmp.eq.s32.totalorder %s20, 1
      %p120 = scmp.ne.s32.totalorder %s115, %s117
      %p121 = scmp.eq.s32.totalorder %s20, 0
      %p122 = por %p120, %p121
      %p123 = scmp.ne.s32.totalorder %s115, %s117
      %p124 = scmp.eq.s32.totalorder %s25, 1
      %p125 = por %p123, %p124
      %p126 = scmp.ne.s32.totalorder %s117, %s118
      %p127 = scmp.eq.s32.totalorder %s25, 0
      %p128 = por %p126, %p127
      %p129 = scmp.ne.s32.totalorder %s117, %s118
      %p130 = scmp.eq.s32.totalorder %s26, 1
      %p131 = por %p129, %p130
      %p133 = scmp.ne.s32.totalorder %s118, %s132
      %p134 = scmp.eq.s32.totalorder %s26, 0
      %p135 = por %p133, %p134
      %s137 = sadd.s32 %s136, 1
      %p140 = scmp.eq.s32.totalorder %s20, 1
      %p141 = scmp.ne.s32.totalorder %s136, %s138
      %p142 = scmp.eq.s32.totalorder %s20, 0
      %p143 = por %p141, %p142
      %p144 = scmp.ne.s32.totalorder %s136, %s138
      %p145 = scmp.eq.s32.totalorder %s25, 1
      %p146 = por %p144, %p145
      %p147 = scmp.ne.s32.totalorder %s138, %s139
      %p148 = scmp.eq.s32.totalorder %s25, 0
      %p149 = por %p147, %p148
      %p150 = scmp.ne.s32.totalorder %s138, %s139
      %p151 = scmp.eq.s32.totalorder %s26, 1
      %p152 = por %p150, %p151
      %p154 = scmp.ne.s32.totalorder %s139, %s153
      %p155 = scmp.eq.s32.totalorder %s26, 0
      %p156 = por %p154, %p155
      %s158 = sadd.s32 %s157, 1
      %p161 = scmp.eq.s32.totalorder %s20, 1
      %p162 = scmp.ne.s32.totalorder %s157, %s159
      %p163 = scmp.eq.s32.totalorder %s20, 0
      %p164 = por %p162, %p163
      %p165 = scmp.ne.s32.totalorder %s157, %s159
      %p166 = scmp.eq.s32.totalorder %s25, 1
      %p167 = por %p165, %p166
      %p168 = scmp.ne.s32.totalorder %s159, %s160
      %p169 = scmp.eq.s32.totalorder %s25, 0
      %p170 = por %p168, %p169
      %p171 = scmp.ne.s32.totalorder %s159, %s160
      %p172 = scmp.eq.s32.totalorder %s26, 1
      %p173 = por %p171, %p172
      %p175 = scmp.ne.s32.totalorder %s160, %s174
      %p176 = scmp.eq.s32.totalorder %s26, 0
      %p177 = por %p175, %p176
      %s178 = ssub.s32 %s27, %s39
      %p179 = scmp.eq.s32.totalorder %s178, 0
      %s181 = sadd.s32 %s180, 1
      %s182 = scalar_select %p179, %s180, %s181
      %p185 = pneg %p179
      %p186 = scmp.eq.s32.totalorder %s20, 1
      %p187 = por %p185, %p186
      %p188 = scmp.ne.s32.totalorder %s180, %s183
      %p189 = scmp.eq.s32.totalorder %s20, 0
      %p190 = por %p188, %p189
      %p191 = scmp.ne.s32.totalorder %s180, %s183
      %p192 = scmp.eq.s32.totalorder %s25, 1
      %p193 = por %p191, %p192
      %p194 = scmp.ne.s32.totalorder %s183, %s184
      %p195 = scmp.eq.s32.totalorder %s25, 0
      %p196 = por %p194, %p195
      %p197 = scmp.ne.s32.totalorder %s183, %s184
      %p198 = scmp.eq.s32.totalorder %s26, 1
      %p199 = por %p197, %p198
      %p201 = scmp.ne.s32.totalorder %s184, %s200
      %p202 = scmp.eq.s32.totalorder %s26, 0
      %p203 = por %p201, %p202
      %p204 = scmp.le.s32.totalorder 1, %s20
      %p205 = scmp.lt.s32.totalorder %s20, 3
      %p206 = pnand %p204, %p205
      %p207 = pneg %p206
      // Predicated region
      $region9: #{tpu_custom_call.1} parent=5 // pred_check
        _
      $region10: #{tpu_custom_call.1} parent=5 // pred_check_branch
        %209 = sbr.rel (%p206) target = $region12
      $region11: #{tpu_custom_call.1} parent=5 // pred_region
        %s210 = ssub.s32 %s20, 1
        // Predicated region
        $region13: #{tpu_custom_call.1} parent=11 // pred_check
          %p211 = pneg %p81
        $region14: #{tpu_custom_call.1} parent=11 // pred_check_branch
          %213 = sbr.rel (%p211) target = $region16
        $region15: #{tpu_custom_call.1} parent=11 // pred_region
          %s215 = ssub.s32 2048, 2048
          %216 = vsyncadd [#allocation8], %s215
          %s217 = sshll.u32 [#allocation7], 4
          %s218 = int_to_ptr.vmem [resolvable:$true] %s217
          %223 = dma.hbm_to_vmem [thread:$0]  %s1, 2048, %s218, [#allocation8], 64, 64, 4
        $region16: #{tpu_custom_call.1} parent=11 // pred_fallthru
          _
        // Predicated region
        $region17: #{tpu_custom_call.1} parent=11 // pred_check
          %p224 = pneg %p128
        $region18: #{tpu_custom_call.1} parent=11 // pred_check_branch
          %226 = sbr.rel (%p224) target = $region20
        $region19: #{tpu_custom_call.1} parent=11 // pred_region
          %s228 = ssub.s32 1024, 1024
          %229 = vsyncadd [#allocation8], %s228
          %s230 = sshll.u32 [#allocation10], 4
          %s231 = int_to_ptr.vmem [resolvable:$true] %s230
          %236 = dma.hbm_to_vmem [thread:$0]  %s3, 1024, %s231, [#allocation8], 64, 64, 4
        $region20: #{tpu_custom_call.1} parent=11 // pred_fallthru
          _
        // Predicated region
        $region21: #{tpu_custom_call.1} parent=11 // pred_check
          %p237 = pneg %p149
        $region22: #{tpu_custom_call.1} parent=11 // pred_check_branch
          %239 = sbr.rel (%p237) target = $region24
        $region23: #{tpu_custom_call.1} parent=11 // pred_region
          %s241 = ssub.s32 1024, 1024
          %242 = vsyncadd [#allocation12], %s241
          %s243 = sshll.u32 [#allocation11], 4
          %s244 = int_to_ptr.vmem [resolvable:$true] %s243
          %249 = dma.hbm_to_vmem [thread:$0]  %s4, 1024, %s244, [#allocation12], 64, 64, 4
        $region24: #{tpu_custom_call.1} parent=11 // pred_fallthru
          _
        // Predicated region
        $region25: #{tpu_custom_call.1} parent=11 // pred_check
          %p250 = pneg %p170
        $region26: #{tpu_custom_call.1} parent=11 // pred_check_branch
          %252 = sbr.rel (%p250) target = $region28
        $region27: #{tpu_custom_call.1} parent=11 // pred_region
          _
        $region28: #{tpu_custom_call.1} parent=11 // pred_fallthru
          _
      $region12: #{tpu_custom_call.1} parent=5 // pred_fallthru
        _
      %p253 = scmp.lt.s32.totalorder %s20, 2
      // Predicated region
      $region29: #{tpu_custom_call.1} parent=5 // pred_check
        %p254 = pneg %p253
      $region30: #{tpu_custom_call.1} parent=5 // pred_check_branch
        %256 = sbr.rel (%p254) target = $region32
      $region31: #{tpu_custom_call.1} parent=5 // pred_region
        // Predicated region
        $region33: #{tpu_custom_call.1} parent=31 // pred_check
          %p257 = pneg %p54
        $region34: #{tpu_custom_call.1} parent=31 // pred_check_branch
          %259 = sbr.rel (%p257) target = $region36
        $region35: #{tpu_custom_call.1} parent=31 // pred_region
          %s260 = sand.u32 %s20, 1
          %s261 = scalar_lea.sflag [#allocation5], %s260
          %s262 = sand.u32 %s44, 1
          %s263 = smul.addr %s262, 64
          %s264 = scalar_lea.vmem [#allocation4], %s263
          %s265 = smul.u32 4, %s27
          %s266 = smul.u32 2, %s28
          %s268 = ssub.s32 1024, 1024
          %269 = vsyncadd %s261, %s268
          %s270 = smul.addr %s265, 2
          %s271 = sadd.s32 %s266, %s270
          %s272 = smul.addr %s271, 128
          %s273 = scalar_lea.hbm %s0, %s272
          %s274 = sshll.u32 %s264, 4
          %s275 = int_to_ptr.vmem [resolvable:$true] %s274
          %280 = dma.hbm_to_vmem [thread:$0]  %s273, 1024, %s275, %s261, 256, 256, 16
        $region36: #{tpu_custom_call.1} parent=31 // pred_fallthru
          _
        // Predicated region
        $region37: #{tpu_custom_call.1} parent=31 // pred_check
          %p281 = pneg %p101
        $region38: #{tpu_custom_call.1} parent=31 // pred_check_branch
          %283 = sbr.rel (%p281) target = $region40
        $region39: #{tpu_custom_call.1} parent=31 // pred_region
          %s284 = sand.u32 %s20, 1
          %s285 = scalar_lea.sflag [#allocation5], %s284
          %s286 = sand.u32 %s91, 1
          %s287 = smul.addr %s286, 64
          %s288 = scalar_lea.vmem [#allocation9], %s287
          %s289 = smul.u32 16, %s27
          %s291 = ssub.s32 1024, 1024
          %292 = vsyncadd %s285, %s291
          %s293 = smul.addr %s289, 64
          %s294 = scalar_lea.hbm %s2, %s293
          %s295 = sshll.u32 %s288, 4
          %s296 = int_to_ptr.vmem [resolvable:$true] %s295
          %301 = dma.hbm_to_vmem [thread:$0]  %s294, 1024, %s296, %s285, 64, 64, 4
        $region40: #{tpu_custom_call.1} parent=31 // pred_fallthru
          _
      $region32: #{tpu_custom_call.1} parent=5 // pred_fallthru
        _
      %p302 = scmp.le.s32.totalorder 1, %s20
      %p303 = scmp.lt.s32.totalorder %s20, 3
      %p304 = pnand %p302, %p303
      %p305 = pneg %p304
      // Predicated region
      $region41: #{tpu_custom_call.1} parent=5 // pred_check
        _
      $region42: #{tpu_custom_call.1} parent=5 // pred_check_branch
        %307 = sbr.rel (%p304) target = $region44
      $region43: #{tpu_custom_call.1} parent=5 // pred_region
        %s308 = ssub.s32 %s20, 1
        %s309 = sand.u32 %s25, 1
        %s310 = scalar_lea.sflag [#allocation5], %s309
        %s311 = sand.u32 %s47, 1
        %s312 = smul.addr %s311, 64
        %s313 = scalar_lea.vmem [#allocation4], %s312
        // Predicated region
        $region45: #{tpu_custom_call.1} parent=43 // pred_check
          %p314 = pneg %p60
        $region46: #{tpu_custom_call.1} parent=43 // pred_check_branch
          %316 = sbr.rel (%p314) target = $region48
        $region47: #{tpu_custom_call.1} parent=43 // pred_region
          %317 = dma.done %s310, 1024
        $region48: #{tpu_custom_call.1} parent=43 // pred_fallthru
          _
        // Predicated region
        $region49: #{tpu_custom_call.1} parent=43 // pred_check
          %p318 = pneg %p81
        $region50: #{tpu_custom_call.1} parent=43 // pred_check_branch
          %320 = sbr.rel (%p318) target = $region52
        $region51: #{tpu_custom_call.1} parent=43 // pred_region
          %321 = dma.done [#allocation8], 2048
        $region52: #{tpu_custom_call.1} parent=43 // pred_fallthru
          _
        %s322 = sand.u32 %s25, 1
        %s323 = scalar_lea.sflag [#allocation5], %s322
        %s324 = sand.u32 %s94, 1
        %s325 = smul.addr %s324, 64
        %s326 = scalar_lea.vmem [#allocation9], %s325
        // Predicated region
        $region53: #{tpu_custom_call.1} parent=43 // pred_check
          %p327 = pneg %p107
        $region54: #{tpu_custom_call.1} parent=43 // pred_check_branch
          %329 = sbr.rel (%p327) target = $region56
        $region55: #{tpu_custom_call.1} parent=43 // pred_region
          %330 = dma.done %s323, 1024
        $region56: #{tpu_custom_call.1} parent=43 // pred_fallthru
          _
        // Predicated region
        $region57: #{tpu_custom_call.1} parent=43 // pred_check
          %p331 = pneg %p128
        $region58: #{tpu_custom_call.1} parent=43 // pred_check_branch
          %333 = sbr.rel (%p331) target = $region60
        $region59: #{tpu_custom_call.1} parent=43 // pred_region
          %334 = dma.done [#allocation8], 1024
        $region60: #{tpu_custom_call.1} parent=43 // pred_fallthru
          _
        // Predicated region
        $region61: #{tpu_custom_call.1} parent=43 // pred_check
          %p335 = pneg %p149
        $region62: #{tpu_custom_call.1} parent=43 // pred_check_branch
          %337 = sbr.rel (%p335) target = $region64
        $region63: #{tpu_custom_call.1} parent=43 // pred_region
          %338 = dma.done [#allocation12], 1024
        $region64: #{tpu_custom_call.1} parent=43 // pred_fallthru
          _
        %s339 = sand.u32 %s25, 1
        %s340 = scalar_lea.sflag [#allocation5], %s339
        %s341 = sand.u32 %s47, 1
        %s342 = smul.addr %s341, 64
        %s343 = scalar_lea.vmem [#allocation4], %s342
        %p344 = pneg %p60
        %p345 = pneg %p57
        %p346 = pneg %p81
        %p347 = pneg %p78
        %s348 = sand.u32 %s25, 1
        %s349 = scalar_lea.sflag [#allocation5], %s348
        %s350 = sand.u32 %s94, 1
        %s351 = smul.addr %s350, 64
        %s352 = scalar_lea.vmem [#allocation9], %s351
        %p353 = pneg %p107
        %p354 = pneg %p104
        %p355 = pneg %p128
        %p356 = pneg %p125
        %p357 = pneg %p149
        %p358 = pneg %p146
        %p359 = pneg %p170
        %p360 = pneg %p167
        %p361 = pneg %p196
        %p362 = pneg %p193
        %s363 = sand.u32 %s183, 1
        %s364 = scalar_lea.sflag [#allocation6], %s363
        %s365 = sand.u32 %s183, 1
        %s366 = smul.addr %s365, 128
        %s367 = scalar_lea.vmem [#allocation13], %s366
        %s368 = smul.u32 4, %s29
        %s369 = smul.u32 2, %s30
        %s370 = smul.u32 16, %s29
        %s371 = smul.u32 16, %s29
        %p373 = scmp.eq.s32.totalorder %s30, 0
        // Predicated region
        $region65: #{tpu_custom_call.1} parent=43 // pred_check
          %p374 = pneg %p373
        $region66: #{tpu_custom_call.1} parent=43 // pred_check_branch
          %376 = sbr.rel (%p374) target = $region68
        $region67: #{tpu_custom_call.1} parent=43 // pred_region
          %377 = vst [vmem:[#allocation2] sm:$0xff] 0.0
          %378 = vst [vmem:[#allocation2 + $0x8] sm:$0xff] 0.0
          %379 = vst [vmem:[#allocation2 + $0x10] sm:$0xff] 0.0
          %380 = vst [vmem:[#allocation2 + $0x18] sm:$0xff] 0.0
          %381 = vst [vmem:[#allocation2 + $0x20] sm:$0xff] 0.0
          %382 = vst [vmem:[#allocation2 + $0x28] sm:$0xff] 0.0
          %383 = vst [vmem:[#allocation2 + $0x30] sm:$0xff] 0.0
          %384 = vst [vmem:[#allocation2 + $0x38] sm:$0xff] 0.0
          %385 = vst [vmem:[#allocation2 + $0x40] sm:$0xff] 0.0
          %386 = vst [vmem:[#allocation2 + $0x48] sm:$0xff] 0.0
          %387 = vst [vmem:[#allocation2 + $0x50] sm:$0xff] 0.0
          %388 = vst [vmem:[#allocation2 + $0x58] sm:$0xff] 0.0
          %389 = vst [vmem:[#allocation2 + $0x60] sm:$0xff] 0.0
          %390 = vst [vmem:[#allocation2 + $0x68] sm:$0xff] 0.0
          %391 = vst [vmem:[#allocation2 + $0x70] sm:$0xff] 0.0
          %392 = vst [vmem:[#allocation2 + $0x78] sm:$0xff] 0.0
          %vm393 = vcmask 7168
          %394 = vst.msk [vmem:[#allocation3] sm:$0xff] %vm393, 0.0
          %395 = vst.msk [vmem:[#allocation3 + $0x8] sm:$0xff] %vm393, 0.0
          %396 = vst.msk [vmem:[#allocation3 + $0x10] sm:$0xff] %vm393, 0.0
          %397 = vst.msk [vmem:[#allocation3 + $0x18] sm:$0xff] %vm393, 0.0
          %398 = vst.msk [vmem:[#allocation3 + $0x20] sm:$0xff] %vm393, 0.0
          %399 = vst.msk [vmem:[#allocation3 + $0x28] sm:$0xff] %vm393, 0.0
          %400 = vst.msk [vmem:[#allocation3 + $0x30] sm:$0xff] %vm393, 0.0
          %401 = vst.msk [vmem:[#allocation3 + $0x38] sm:$0xff] %vm393, 0.0
          %402 = vst.msk [vmem:[#allocation3 + $0x40] sm:$0xff] %vm393, 0.0
          %403 = vst.msk [vmem:[#allocation3 + $0x48] sm:$0xff] %vm393, 0.0
          %404 = vst.msk [vmem:[#allocation3 + $0x50] sm:$0xff] %vm393, 0.0
          %405 = vst.msk [vmem:[#allocation3 + $0x58] sm:$0xff] %vm393, 0.0
          %406 = vst.msk [vmem:[#allocation3 + $0x60] sm:$0xff] %vm393, 0.0
          %407 = vst.msk [vmem:[#allocation3 + $0x68] sm:$0xff] %vm393, 0.0
          %408 = vst.msk [vmem:[#allocation3 + $0x70] sm:$0xff] %vm393, 0.0
          %409 = vst.msk [vmem:[#allocation3 + $0x78] sm:$0xff] %vm393, 0.0
          %v410 = vld [vmem:[%s326] sm:$0xf]
          %v411 = vld [vmem:[%s326 + $0x4] sm:$0xf]
          %v412 = vld [vmem:[%s326 + $0x8] sm:$0xf]
          %v413 = vld [vmem:[%s326 + $0xc] sm:$0xf]
          %v414 = vld [vmem:[%s326 + $0x10] sm:$0xf]
          %v415 = vld [vmem:[%s326 + $0x14] sm:$0xf]
          %v416 = vld [vmem:[%s326 + $0x18] sm:$0xf]
          %v417 = vld [vmem:[%s326 + $0x1c] sm:$0xf]
          %v418 = vld [vmem:[%s326 + $0x20] sm:$0xf]
          %v419 = vld [vmem:[%s326 + $0x24] sm:$0xf]
          %v420 = vld [vmem:[%s326 + $0x28] sm:$0xf]
          %v421 = vld [vmem:[%s326 + $0x2c] sm:$0xf]
          %v422 = vld [vmem:[%s326 + $0x30] sm:$0xf]
          %v423 = vld [vmem:[%s326 + $0x34] sm:$0xf]
          %v424 = vld [vmem:[%s326 + $0x38] sm:$0xf]
          %v425 = vld [vmem:[%s326 + $0x3c] sm:$0xf]
          %v426 = vld [vmem:[#allocation10] sm:$0xf]
          %v427 = vld [vmem:[#allocation10 + $0x4] sm:$0xf]
          %v428 = vld [vmem:[#allocation10 + $0x8] sm:$0xf]
          %v429 = vld [vmem:[#allocation10 + $0xc] sm:$0xf]
          %v430 = vld [vmem:[#allocation10 + $0x10] sm:$0xf]
          %v431 = vld [vmem:[#allocation10 + $0x14] sm:$0xf]
          %v432 = vld [vmem:[#allocation10 + $0x18] sm:$0xf]
          %v433 = vld [vmem:[#allocation10 + $0x1c] sm:$0xf]
          %v434 = vld [vmem:[#allocation10 + $0x20] sm:$0xf]
          %v435 = vld [vmem:[#allocation10 + $0x24] sm:$0xf]
          %v436 = vld [vmem:[#allocation10 + $0x28] sm:$0xf]
          %v437 = vld [vmem:[#allocation10 + $0x2c] sm:$0xf]
          %v438 = vld [vmem:[#allocation10 + $0x30] sm:$0xf]
          %v439 = vld [vmem:[#allocation10 + $0x34] sm:$0xf]
          %v440 = vld [vmem:[#allocation10 + $0x38] sm:$0xf]
          %v441 = vld [vmem:[#allocation10 + $0x3c] sm:$0xf]
          %v442 = vld [vmem:[%s5] sm:$0x1]
          %v444 = vlaneseq
          %v445 = vshrl.u32 %v444, 7
          %v446 = vsub.s32 0, %v445
          %v447 = vrot.slane %v442, %v446
          %v465 = vunpack.c.l.b16 %v410
          %v466 = vunpack.c.l.b16 %v411
          %v467 = vunpack.c.l.b16 %v412
          %v468 = vunpack.c.l.b16 %v413
          %v469 = vunpack.c.l.b16 %v414
          %v470 = vunpack.c.l.b16 %v415
          %v471 = vunpack.c.l.b16 %v416
          %v472 = vunpack.c.l.b16 %v417
          %v473 = vunpack.c.l.b16 %v418
          %v474 = vunpack.c.l.b16 %v419
          %v475 = vunpack.c.l.b16 %v420
          %v476 = vunpack.c.l.b16 %v421
          %v477 = vunpack.c.l.b16 %v422
          %v478 = vunpack.c.l.b16 %v423
          %v479 = vunpack.c.l.b16 %v424
          %v480 = vunpack.c.l.b16 %v425
          %v481 = vpack.c.b16 %v466, %v465
          %v482 = vpack.c.b16 %v468, %v467
          %v483 = vpack.c.b16 %v470, %v469
          %v484 = vpack.c.b16 %v472, %v471
          %v485 = vpack.c.b16 %v474, %v473
          %v486 = vpack.c.b16 %v476, %v475
          %v487 = vpack.c.b16 %v478, %v477
          %v488 = vpack.c.b16 %v480, %v479
          %v513 = vunpack.c.l.b16 %v426
          %v514 = vunpack.c.l.b16 %v427
          %v515 = vunpack.c.l.b16 %v428
          %v516 = vunpack.c.l.b16 %v429
          %v517 = vunpack.c.l.b16 %v430
          %v518 = vunpack.c.l.b16 %v431
          %v519 = vunpack.c.l.b16 %v432
          %v520 = vunpack.c.l.b16 %v433
          %v521 = vunpack.c.l.b16 %v434
          %v522 = vunpack.c.l.b16 %v435
          %v523 = vunpack.c.l.b16 %v436
          %v524 = vunpack.c.l.b16 %v437
          %v525 = vunpack.c.l.b16 %v438
          %v526 = vunpack.c.l.b16 %v439
          %v527 = vunpack.c.l.b16 %v440
          %v528 = vunpack.c.l.b16 %v441
          %v529 = vpack.c.b16 %v514, %v513
          %v530 = vpack.c.b16 %v516, %v515
          %v531 = vpack.c.b16 %v518, %v517
          %v532 = vpack.c.b16 %v520, %v519
          %v533 = vpack.c.b16 %v522, %v521
          %v534 = vpack.c.b16 %v524, %v523
          %v535 = vpack.c.b16 %v526, %v525
          %v536 = vpack.c.b16 %v528, %v527
          %545 = vmatprep.subr.bf16.mxu0 0
          %546 = vmatpush1.bf16.msra.mxu0 %v536
          %547 = vmatprep.subr.bf16.mxu0 0
          %548 = vmatpush1.bf16.msra.mxu0 %v535
          %549 = vmatprep.subr.bf16.mxu0 0
          %550 = vmatpush1.bf16.msra.mxu0 %v534
          %551 = vmatprep.subr.bf16.mxu0 0
          %552 = vmatpush1.bf16.msra.mxu0 %v533
          %553 = vmatprep.subr.bf16.mxu0 0
          %554 = vmatpush1.bf16.msra.mxu0 %v532
          %555 = vmatprep.subr.bf16.mxu0 0
          %556 = vmatpush1.bf16.msra.mxu0 %v531
          %557 = vmatprep.subr.bf16.mxu0 0
          %558 = vmatpush1.bf16.msra.mxu0 %v530
          %559 = vmatprep.subr.bf16.mxu0 0
          %560 = vmatpush1.bf16.msra.mxu0 %v529
          %561 = vmatprep.subr.bf16.mxu0 0
          %562 = vmatpush2.bf16.msra.mxu0 0
          %563 = vmatprep.subr.bf16.mxu0 0
          %564 = vmatpush2.bf16.msra.mxu0 0
          %565 = vmatprep.subr.bf16.mxu0 0
          %566 = vmatpush2.bf16.msra.mxu0 0
          %567 = vmatprep.subr.bf16.mxu0 0
          %568 = vmatpush2.bf16.msra.mxu0 0
          %569 = vmatprep.subr.bf16.mxu0 0
          %570 = vmatpush2.bf16.msra.mxu0 0
          %571 = vmatprep.subr.bf16.mxu0 0
          %572 = vmatpush2.bf16.msra.mxu0 0
          %573 = vmatprep.subr.bf16.mxu0 0
          %574 = vmatpush2.bf16.msra.mxu0 0
          %575 = vmatprep.subr.bf16.mxu0 0
          %576 = vmatpush2.bf16.msra.mxu0 0
          %577 = vmatprep.mubr.bf16.mxu0 0
          %578 = vmatmul.mubr.bf16.gmra.mxu0 %v481
          %v579 = vpop.f32.mrf.mxu0
          %v580 = vadd.f32 %v447, %v579
          %v581 = vpop.f32.mrf.mxu0
          %v582 = vpop.f32.mrf.mxu0
          %v583 = vadd.f32 %v447, %v582
          %v584 = vpop.f32.mrf.mxu0
          %585 = vmatprep.mubr.bf16.mxu0 0
          %586 = vmatmul.mubr.bf16.gmra.mxu0 %v482
          %v587 = vpop.f32.mrf.mxu0
          %v588 = vadd.f32 %v447, %v587
          %v589 = vpop.f32.mrf.mxu0
          %v590 = vpop.f32.mrf.mxu0
          %v591 = vadd.f32 %v447, %v590
          %v592 = vpop.f32.mrf.mxu0
          %593 = vmatprep.mubr.bf16.mxu0 0
          %594 = vmatmul.mubr.bf16.gmra.mxu0 %v483
          %v595 = vpop.f32.mrf.mxu0
          %v596 = vadd.f32 %v447, %v595
          %v597 = vpop.f32.mrf.mxu0
          %v598 = vpop.f32.mrf.mxu0
          %v599 = vadd.f32 %v447, %v598
          %v600 = vpop.f32.mrf.mxu0
          %601 = vmatprep.mubr.bf16.mxu0 0
          %602 = vmatmul.mubr.bf16.gmra.mxu0 %v484
          %v603 = vpop.f32.mrf.mxu0
          %v604 = vadd.f32 %v447, %v603
          %v605 = vpop.f32.mrf.mxu0
          %v606 = vpop.f32.mrf.mxu0
          %v607 = vadd.f32 %v447, %v606
          %v608 = vpop.f32.mrf.mxu0
          %609 = vmatprep.mubr.bf16.mxu0 0
          %610 = vmatmul.mubr.bf16.gmra.mxu0 %v485
          %v611 = vpop.f32.mrf.mxu0
          %v612 = vadd.f32 %v447, %v611
          %v613 = vpop.f32.mrf.mxu0
          %v614 = vpop.f32.mrf.mxu0
          %v615 = vadd.f32 %v447, %v614
          %v616 = vpop.f32.mrf.mxu0
          %617 = vmatprep.mubr.bf16.mxu0 0
          %618 = vmatmul.mubr.bf16.gmra.mxu0 %v486
          %v619 = vpop.f32.mrf.mxu0
          %v620 = vadd.f32 %v447, %v619
          %v621 = vpop.f32.mrf.mxu0
          %v622 = vpop.f32.mrf.mxu0
          %v623 = vadd.f32 %v447, %v622
          %v624 = vpop.f32.mrf.mxu0
          %625 = vmatprep.mubr.bf16.mxu0 0
          %626 = vmatmul.mubr.bf16.gmra.mxu0 %v487
          %v627 = vpop.f32.mrf.mxu0
          %v628 = vadd.f32 %v447, %v627
          %v629 = vpop.f32.mrf.mxu0
          %v630 = vpop.f32.mrf.mxu0
          %v631 = vadd.f32 %v447, %v630
          %v632 = vpop.f32.mrf.mxu0
          %633 = vmatprep.mubr.bf16.mxu0 0
          %634 = vmatmul.mubr.bf16.gmra.mxu0 %v488
          %v635 = vpop.f32.mrf.mxu0
          %v636 = vadd.f32 %v447, %v635
          %v637 = vpop.f32.mrf.mxu0
          %v638 = vpop.f32.mrf.mxu0
          %v639 = vadd.f32 %v447, %v638
          %v640 = vpop.f32.mrf.mxu0
          %641 = vdwg.mxu0
          %642 = vst [vmem:[%s367] sm:$0xff] %v580
          %643 = vst [vmem:[%s367 + $0x8] sm:$0xff] %v583
          %644 = vst [vmem:[%s367 + $0x10] sm:$0xff] %v588
          %645 = vst [vmem:[%s367 + $0x18] sm:$0xff] %v591
          %646 = vst [vmem:[%s367 + $0x20] sm:$0xff] %v596
          %647 = vst [vmem:[%s367 + $0x28] sm:$0xff] %v599
          %648 = vst [vmem:[%s367 + $0x30] sm:$0xff] %v604
          %649 = vst [vmem:[%s367 + $0x38] sm:$0xff] %v607
          %650 = vst [vmem:[%s367 + $0x40] sm:$0xff] %v612
          %651 = vst [vmem:[%s367 + $0x48] sm:$0xff] %v615
          %652 = vst [vmem:[%s367 + $0x50] sm:$0xff] %v620
          %653 = vst [vmem:[%s367 + $0x58] sm:$0xff] %v623
          %654 = vst [vmem:[%s367 + $0x60] sm:$0xff] %v628
          %655 = vst [vmem:[%s367 + $0x68] sm:$0xff] %v631
          %656 = vst [vmem:[%s367 + $0x70] sm:$0xff] %v636
          %657 = vst [vmem:[%s367 + $0x78] sm:$0xff] %v639
        $region68: #{tpu_custom_call.1} parent=43 // pred_fallthru
          _
        %v658 = vld [vmem:[%s313] sm:$0xff]
        %v659 = vld [vmem:[%s313 + $0x8] sm:$0xff]
        %v660 = vld [vmem:[%s313 + $0x10] sm:$0xff]
        %v661 = vld [vmem:[%s313 + $0x18] sm:$0xff]
        %v662 = vld [vmem:[%s313 + $0x20] sm:$0xff]
        %v663 = vld [vmem:[%s313 + $0x28] sm:$0xff]
        %v664 = vld [vmem:[%s313 + $0x30] sm:$0xff]
        %v665 = vld [vmem:[%s313 + $0x38] sm:$0xff]
        %v666 = vunpack.c.l.s8.bf16 %v658
        %v667 = vunpack.c.l.s8.bf16 %v659
        %v668 = vunpack.c.h.s8.bf16 %v658
        %v669 = vunpack.c.h.s8.bf16 %v659
        %v670 = vunpack.c.l.s8.bf16 %v660
        %v671 = vunpack.c.l.s8.bf16 %v661
        %v672 = vunpack.c.h.s8.bf16 %v660
        %v673 = vunpack.c.h.s8.bf16 %v661
        %v674 = vunpack.c.l.s8.bf16 %v662
        %v675 = vunpack.c.l.s8.bf16 %v663
        %v676 = vunpack.c.h.s8.bf16 %v662
        %v677 = vunpack.c.h.s8.bf16 %v663
        %v678 = vunpack.c.l.s8.bf16 %v664
        %v679 = vunpack.c.l.s8.bf16 %v665
        %v680 = vunpack.c.h.s8.bf16 %v664
        %v681 = vunpack.c.h.s8.bf16 %v665
        %v682 = vld [vmem:[#allocation3] sm:$0xff]
        %v683 = vld [vmem:[#allocation3 + $0x8] sm:$0xff]
        %v684 = vld [vmem:[#allocation3 + $0x10] sm:$0xff]
        %v685 = vld [vmem:[#allocation3 + $0x18] sm:$0xff]
        %v686 = vld [vmem:[#allocation3 + $0x20] sm:$0xff]
        %v687 = vld [vmem:[#allocation3 + $0x28] sm:$0xff]
        %v688 = vld [vmem:[#allocation3 + $0x30] sm:$0xff]
        %v689 = vld [vmem:[#allocation3 + $0x38] sm:$0xff]
        %v690 = vld [vmem:[#allocation3 + $0x40] sm:$0xff]
        %v691 = vld [vmem:[#allocation3 + $0x48] sm:$0xff]
        %v692 = vld [vmem:[#allocation3 + $0x50] sm:$0xff]
        %v693 = vld [vmem:[#allocation3 + $0x58] sm:$0xff]
        %v694 = vld [vmem:[#allocation3 + $0x60] sm:$0xff]
        %v695 = vld [vmem:[#allocation3 + $0x68] sm:$0xff]
        %v696 = vld [vmem:[#allocation3 + $0x70] sm:$0xff]
        %v697 = vld [vmem:[#allocation3 + $0x78] sm:$0xff]
        %v698 = vunpack.c.l.bf16 %v666
        %v699 = vunpack.c.l.bf16 %v667
        %v700 = vunpack.c.h.bf16 %v666
        %v701 = vunpack.c.h.bf16 %v667
        %v702 = vunpack.c.l.bf16 %v668
        %v703 = vunpack.c.l.bf16 %v669
        %v704 = vunpack.c.h.bf16 %v668
        %v705 = vunpack.c.h.bf16 %v669
        %v706 = vunpack.c.l.bf16 %v670
        %v707 = vunpack.c.l.bf16 %v671
        %v708 = vunpack.c.h.bf16 %v670
        %v709 = vunpack.c.h.bf16 %v671
        %v710 = vunpack.c.l.bf16 %v672
        %v711 = vunpack.c.l.bf16 %v673
        %v712 = vunpack.c.h.bf16 %v672
        %v713 = vunpack.c.h.bf16 %v673
        %v714 = vunpack.c.l.bf16 %v674
        %v715 = vunpack.c.l.bf16 %v675
        %v716 = vunpack.c.h.bf16 %v674
        %v717 = vunpack.c.h.bf16 %v675
        %v718 = vunpack.c.l.bf16 %v676
        %v719 = vunpack.c.l.bf16 %v677
        %v720 = vunpack.c.h.bf16 %v676
        %v721 = vunpack.c.h.bf16 %v677
        %v722 = vunpack.c.l.bf16 %v678
        %v723 = vunpack.c.l.bf16 %v679
        %v724 = vunpack.c.h.bf16 %v678
        %v725 = vunpack.c.h.bf16 %v679
        %v726 = vunpack.c.l.bf16 %v680
        %v727 = vunpack.c.l.bf16 %v681
        %v728 = vunpack.c.h.bf16 %v680
        %v729 = vunpack.c.h.bf16 %v681
        %v730 = vadd.f32 %v698, %v699
        %731 = vadd.xlane.f32.xlu0 %v730
        %v732 = vpop.xlane.xlu0 %731
        %v733 = vadd.f32 %v700, %v701
        %734 = vadd.xlane.f32.xlu0 %v733
        %v735 = vpop.xlane.xlu0 %734
        %v736 = vadd.f32 %v702, %v703
        %737 = vadd.xlane.f32.xlu0 %v736
        %v738 = vpop.xlane.xlu0 %737
        %v739 = vadd.f32 %v704, %v705
        %740 = vadd.xlane.f32.xlu0 %v739
        %v741 = vpop.xlane.xlu0 %740
        %v742 = vadd.f32 %v706, %v707
        %743 = vadd.xlane.f32.xlu0 %v742
        %v744 = vpop.xlane.xlu0 %743
        %v745 = vadd.f32 %v708, %v709
        %746 = vadd.xlane.f32.xlu0 %v745
        %v747 = vpop.xlane.xlu0 %746
        %v748 = vadd.f32 %v710, %v711
        %749 = vadd.xlane.f32.xlu0 %v748
        %v750 = vpop.xlane.xlu0 %749
        %v751 = vadd.f32 %v712, %v713
        %752 = vadd.xlane.f32.xlu0 %v751
        %v753 = vpop.xlane.xlu0 %752
        %v754 = vadd.f32 %v714, %v715
        %755 = vadd.xlane.f32.xlu0 %v754
        %v756 = vpop.xlane.xlu0 %755
        %v757 = vadd.f32 %v716, %v717
        %758 = vadd.xlane.f32.xlu0 %v757
        %v759 = vpop.xlane.xlu0 %758
        %v760 = vadd.f32 %v718, %v719
        %761 = vadd.xlane.f32.xlu0 %v760
        %v762 = vpop.xlane.xlu0 %761
        %v763 = vadd.f32 %v720, %v721
        %764 = vadd.xlane.f32.xlu0 %v763
        %v765 = vpop.xlane.xlu0 %764
        %v766 = vadd.f32 %v722, %v723
        %767 = vadd.xlane.f32.xlu0 %v766
        %v768 = vpop.xlane.xlu0 %767
        %v769 = vadd.f32 %v724, %v725
        %770 = vadd.xlane.f32.xlu0 %v769
        %v771 = vpop.xlane.xlu0 %770
        %v772 = vadd.f32 %v726, %v727
        %773 = vadd.xlane.f32.xlu0 %v772
        %v774 = vpop.xlane.xlu0 %773
        %v775 = vadd.f32 %v728, %v729
        %776 = vadd.xlane.f32.xlu0 %v775
        %v777 = vpop.xlane.xlu0 %776
        %v778 = vadd.f32 %v682, %v732
        %v779 = vadd.f32 %v683, %v735
        %v780 = vadd.f32 %v684, %v738
        %v781 = vadd.f32 %v685, %v741
        %v782 = vadd.f32 %v686, %v744
        %v783 = vadd.f32 %v687, %v747
        %v784 = vadd.f32 %v688, %v750
        %v785 = vadd.f32 %v689, %v753
        %v786 = vadd.f32 %v690, %v756
        %v787 = vadd.f32 %v691, %v759
        %v788 = vadd.f32 %v692, %v762
        %v789 = vadd.f32 %v693, %v765
        %v790 = vadd.f32 %v694, %v768
        %v791 = vadd.f32 %v695, %v771
        %v792 = vadd.f32 %v696, %v774
        %v793 = vadd.f32 %v697, %v777
        %vm794 = vcmask 7168
        %795 = vst.msk [vmem:[#allocation3] sm:$0xff] %vm794, %v778
        %796 = vst.msk [vmem:[#allocation3 + $0x8] sm:$0xff] %vm794, %v779
        %797 = vst.msk [vmem:[#allocation3 + $0x10] sm:$0xff] %vm794, %v780
        %798 = vst.msk [vmem:[#allocation3 + $0x18] sm:$0xff] %vm794, %v781
        %799 = vst.msk [vmem:[#allocation3 + $0x20] sm:$0xff] %vm794, %v782
        %800 = vst.msk [vmem:[#allocation3 + $0x28] sm:$0xff] %vm794, %v783
        %801 = vst.msk [vmem:[#allocation3 + $0x30] sm:$0xff] %vm794, %v784
        %802 = vst.msk [vmem:[#allocation3 + $0x38] sm:$0xff] %vm794, %v785
        %803 = vst.msk [vmem:[#allocation3 + $0x40] sm:$0xff] %vm794, %v786
        %804 = vst.msk [vmem:[#allocation3 + $0x48] sm:$0xff] %vm794, %v787
        %805 = vst.msk [vmem:[#allocation3 + $0x50] sm:$0xff] %vm794, %v788
        %806 = vst.msk [vmem:[#allocation3 + $0x58] sm:$0xff] %vm794, %v789
        %807 = vst.msk [vmem:[#allocation3 + $0x60] sm:$0xff] %vm794, %v790
        %808 = vst.msk [vmem:[#allocation3 + $0x68] sm:$0xff] %vm794, %v791
        %809 = vst.msk [vmem:[#allocation3 + $0x70] sm:$0xff] %vm794, %v792
        %810 = vst.msk [vmem:[#allocation3 + $0x78] sm:$0xff] %vm794, %v793
        %s811 = smul.u32 %s30, 256
        %s812 = sshra.s32 %s811, 3
        %s813 = sand.u32 %s811, 7
        %s814 = smul.addr %s812, 4
        %s815 = scalar_lea.vmem [#allocation7], %s814
        %v816 = vld [vmem:[%s815] sm:$0xf]
        %v817 = vld [vmem:[%s815 + $0x4] sm:$0xf]
        %v818 = vld [vmem:[%s815 + $0x8] sm:$0xf]
        %v819 = vld [vmem:[%s815 + $0xc] sm:$0xf]
        %v820 = vld [vmem:[%s815 + $0x10] sm:$0xf]
        %v821 = vld [vmem:[%s815 + $0x14] sm:$0xf]
        %v822 = vld [vmem:[%s815 + $0x18] sm:$0xf]
        %v823 = vld [vmem:[%s815 + $0x1c] sm:$0xf]
        %v824 = vld [vmem:[%s815 + $0x20] sm:$0xf]
        %v825 = vld [vmem:[%s815 + $0x24] sm:$0xf]
        %v826 = vld [vmem:[%s815 + $0x28] sm:$0xf]
        %v827 = vld [vmem:[%s815 + $0x2c] sm:$0xf]
        %v828 = vld [vmem:[%s815 + $0x30] sm:$0xf]
        %v829 = vld [vmem:[%s815 + $0x34] sm:$0xf]
        %v830 = vld [vmem:[%s815 + $0x38] sm:$0xf]
        %v831 = vld [vmem:[%s815 + $0x3c] sm:$0xf]
        %v832 = vld [vmem:[%s815 + $0x40] sm:$0xf]
        %v833 = vld [vmem:[%s815 + $0x44] sm:$0xf]
        %v834 = vld [vmem:[%s815 + $0x48] sm:$0xf]
        %v835 = vld [vmem:[%s815 + $0x4c] sm:$0xf]
        %v836 = vld [vmem:[%s815 + $0x50] sm:$0xf]
        %v837 = vld [vmem:[%s815 + $0x54] sm:$0xf]
        %v838 = vld [vmem:[%s815 + $0x58] sm:$0xf]
        %v839 = vld [vmem:[%s815 + $0x5c] sm:$0xf]
        %v840 = vld [vmem:[%s815 + $0x60] sm:$0xf]
        %v841 = vld [vmem:[%s815 + $0x64] sm:$0xf]
        %v842 = vld [vmem:[%s815 + $0x68] sm:$0xf]
        %v843 = vld [vmem:[%s815 + $0x6c] sm:$0xf]
        %v844 = vld [vmem:[%s815 + $0x70] sm:$0xf]
        %v845 = vld [vmem:[%s815 + $0x74] sm:$0xf]
        %v846 = vld [vmem:[%s815 + $0x78] sm:$0xf]
        %v847 = vld [vmem:[%s815 + $0x7c] sm:$0xf]
        %v848 = vld [vmem:[#allocation2] sm:$0xff]
        %v849 = vld [vmem:[#allocation2 + $0x8] sm:$0xff]
        %v850 = vld [vmem:[#allocation2 + $0x10] sm:$0xff]
        %v851 = vld [vmem:[#allocation2 + $0x18] sm:$0xff]
        %v852 = vld [vmem:[#allocation2 + $0x20] sm:$0xff]
        %v853 = vld [vmem:[#allocation2 + $0x28] sm:$0xff]
        %v854 = vld [vmem:[#allocation2 + $0x30] sm:$0xff]
        %v855 = vld [vmem:[#allocation2 + $0x38] sm:$0xff]
        %v856 = vld [vmem:[#allocation2 + $0x40] sm:$0xff]
        %v857 = vld [vmem:[#allocation2 + $0x48] sm:$0xff]
        %v858 = vld [vmem:[#allocation2 + $0x50] sm:$0xff]
        %v859 = vld [vmem:[#allocation2 + $0x58] sm:$0xff]
        %v860 = vld [vmem:[#allocation2 + $0x60] sm:$0xff]
        %v861 = vld [vmem:[#allocation2 + $0x68] sm:$0xff]
        %v862 = vld [vmem:[#allocation2 + $0x70] sm:$0xff]
        %v863 = vld [vmem:[#allocation2 + $0x78] sm:$0xff]
        %v896 = vunpack.c.l.b16 %v816
        %v897 = vunpack.c.l.b16 %v817
        %v898 = vunpack.c.l.b16 %v818
        %v899 = vunpack.c.l.b16 %v819
        %v900 = vunpack.c.l.b16 %v820
        %v901 = vunpack.c.l.b16 %v821
        %v902 = vunpack.c.l.b16 %v822
        %v903 = vunpack.c.l.b16 %v823
        %v904 = vunpack.c.l.b16 %v824
        %v905 = vunpack.c.l.b16 %v825
        %v906 = vunpack.c.l.b16 %v826
        %v907 = vunpack.c.l.b16 %v827
        %v908 = vunpack.c.l.b16 %v828
        %v909 = vunpack.c.l.b16 %v829
        %v910 = vunpack.c.l.b16 %v830
        %v911 = vunpack.c.l.b16 %v831
        %v912 = vunpack.c.l.b16 %v832
        %v913 = vunpack.c.l.b16 %v833
        %v914 = vunpack.c.l.b16 %v834
        %v915 = vunpack.c.l.b16 %v835
        %v916 = vunpack.c.l.b16 %v836
        %v917 = vunpack.c.l.b16 %v837
        %v918 = vunpack.c.l.b16 %v838
        %v919 = vunpack.c.l.b16 %v839
        %v920 = vunpack.c.l.b16 %v840
        %v921 = vunpack.c.l.b16 %v841
        %v922 = vunpack.c.l.b16 %v842
        %v923 = vunpack.c.l.b16 %v843
        %v924 = vunpack.c.l.b16 %v844
        %v925 = vunpack.c.l.b16 %v845
        %v926 = vunpack.c.l.b16 %v846
        %v927 = vunpack.c.l.b16 %v847
        %v928 = vpack.c.b16 %v897, %v896
        %v929 = vpack.c.b16 %v899, %v898
        %v930 = vpack.c.b16 %v901, %v900
        %v931 = vpack.c.b16 %v903, %v902
        %v932 = vpack.c.b16 %v905, %v904
        %v933 = vpack.c.b16 %v907, %v906
        %v934 = vpack.c.b16 %v909, %v908
        %v935 = vpack.c.b16 %v911, %v910
        %v936 = vpack.c.b16 %v913, %v912
        %v937 = vpack.c.b16 %v915, %v914
        %v938 = vpack.c.b16 %v917, %v916
        %v939 = vpack.c.b16 %v919, %v918
        %v940 = vpack.c.b16 %v921, %v920
        %v941 = vpack.c.b16 %v923, %v922
        %v942 = vpack.c.b16 %v925, %v924
        %v943 = vpack.c.b16 %v927, %v926
        %960 = vmatprep.subr.bf16.mxu0 0
        %961 = vmatpush1.bf16.msra.mxu0 %v935
        %962 = vmatprep.subr.bf16.mxu0 0
        %963 = vmatpush1.bf16.msra.mxu0 %v934
        %964 = vmatprep.subr.bf16.mxu0 0
        %965 = vmatpush1.bf16.msra.mxu0 %v933
        %966 = vmatprep.subr.bf16.mxu0 0
        %967 = vmatpush1.bf16.msra.mxu0 %v932
        %968 = vmatprep.subr.bf16.mxu0 0
        %969 = vmatpush1.bf16.msra.mxu0 %v931
        %970 = vmatprep.subr.bf16.mxu0 0
        %971 = vmatpush1.bf16.msra.mxu0 %v930
        %972 = vmatprep.subr.bf16.mxu0 0
        %973 = vmatpush1.bf16.msra.mxu0 %v929
        %974 = vmatprep.subr.bf16.mxu0 0
        %975 = vmatpush1.bf16.msra.mxu0 %v928
        %976 = vmatprep.subr.bf16.mxu0 0
        %977 = vmatpush2.bf16.msra.mxu0 %v943
        %978 = vmatprep.subr.bf16.mxu0 0
        %979 = vmatpush2.bf16.msra.mxu0 %v942
        %980 = vmatprep.subr.bf16.mxu0 0
        %981 = vmatpush2.bf16.msra.mxu0 %v941
        %982 = vmatprep.subr.bf16.mxu0 0
        %983 = vmatpush2.bf16.msra.mxu0 %v940
        %984 = vmatprep.subr.bf16.mxu0 0
        %985 = vmatpush2.bf16.msra.mxu0 %v939
        %986 = vmatprep.subr.bf16.mxu0 0
        %987 = vmatpush2.bf16.msra.mxu0 %v938
        %988 = vmatprep.subr.bf16.mxu0 0
        %989 = vmatpush2.bf16.msra.mxu0 %v937
        %990 = vmatprep.subr.bf16.mxu0 0
        %991 = vmatpush2.bf16.msra.mxu0 %v936
        %992 = vmatprep.mubr.bf16.mxu0 %v667
        %993 = vmatmul.mubr.bf16.gmra.mxu0 %v666
        %v994 = vpop.f32.mrf.mxu0
        %v995 = vadd.f32 0.0, %v994
        %v996 = vpop.f32.mrf.mxu0
        %v997 = vpop.f32.mrf.mxu0
        %v998 = vadd.f32 0.0, %v997
        %v999 = vpop.f32.mrf.mxu0
        %1000 = vmatprep.mubr.bf16.mxu0 %v669
        %1001 = vmatmul.mubr.bf16.gmra.mxu0 %v668
        %v1002 = vpop.f32.mrf.mxu0
        %v1003 = vadd.f32 0.0, %v1002
        %v1004 = vpop.f32.mrf.mxu0
        %v1005 = vpop.f32.mrf.mxu0
        %v1006 = vadd.f32 0.0, %v1005
        %v1007 = vpop.f32.mrf.mxu0
        %1008 = vmatprep.mubr.bf16.mxu0 %v671
        %1009 = vmatmul.mubr.bf16.gmra.mxu0 %v670
        %v1010 = vpop.f32.mrf.mxu0
        %v1011 = vadd.f32 0.0, %v1010
        %v1012 = vpop.f32.mrf.mxu0
        %v1013 = vpop.f32.mrf.mxu0
        %v1014 = vadd.f32 0.0, %v1013
        %v1015 = vpop.f32.mrf.mxu0
        %1016 = vmatprep.mubr.bf16.mxu0 %v673
        %1017 = vmatmul.mubr.bf16.gmra.mxu0 %v672
        %v1018 = vpop.f32.mrf.mxu0
        %v1019 = vadd.f32 0.0, %v1018
        %v1020 = vpop.f32.mrf.mxu0
        %v1021 = vpop.f32.mrf.mxu0
        %v1022 = vadd.f32 0.0, %v1021
        %v1023 = vpop.f32.mrf.mxu0
        %1024 = vmatprep.mubr.bf16.mxu0 %v675
        %1025 = vmatmul.mubr.bf16.gmra.mxu0 %v674
        %v1026 = vpop.f32.mrf.mxu0
        %v1027 = vadd.f32 0.0, %v1026
        %v1028 = vpop.f32.mrf.mxu0
        %v1029 = vpop.f32.mrf.mxu0
        %v1030 = vadd.f32 0.0, %v1029
        %v1031 = vpop.f32.mrf.mxu0
        %1032 = vmatprep.mubr.bf16.mxu0 %v677
        %1033 = vmatmul.mubr.bf16.gmra.mxu0 %v676
        %v1034 = vpop.f32.mrf.mxu0
        %v1035 = vadd.f32 0.0, %v1034
        %v1036 = vpop.f32.mrf.mxu0
        %v1037 = vpop.f32.mrf.mxu0
        %v1038 = vadd.f32 0.0, %v1037
        %v1039 = vpop.f32.mrf.mxu0
        %1040 = vmatprep.mubr.bf16.mxu0 %v679
        %1041 = vmatmul.mubr.bf16.gmra.mxu0 %v678
        %v1042 = vpop.f32.mrf.mxu0
        %v1043 = vadd.f32 0.0, %v1042
        %v1044 = vpop.f32.mrf.mxu0
        %v1045 = vpop.f32.mrf.mxu0
        %v1046 = vadd.f32 0.0, %v1045
        %v1047 = vpop.f32.mrf.mxu0
        %1048 = vmatprep.mubr.bf16.mxu0 %v681
        %1049 = vmatmul.mubr.bf16.gmra.mxu0 %v680
        %v1050 = vpop.f32.mrf.mxu0
        %v1051 = vadd.f32 0.0, %v1050
        %v1052 = vpop.f32.mrf.mxu0
        %v1053 = vpop.f32.mrf.mxu0
        %v1054 = vadd.f32 0.0, %v1053
        %v1055 = vpop.f32.mrf.mxu0
        %1056 = vdwg.mxu0
        %v1057 = vadd.f32 %v848, %v995
        %v1058 = vadd.f32 %v849, %v998
        %v1059 = vadd.f32 %v850, %v1003
        %v1060 = vadd.f32 %v851, %v1006
        %v1061 = vadd.f32 %v852, %v1011
        %v1062 = vadd.f32 %v853, %v1014
        %v1063 = vadd.f32 %v854, %v1019
        %v1064 = vadd.f32 %v855, %v1022
        %v1065 = vadd.f32 %v856, %v1027
        %v1066 = vadd.f32 %v857, %v1030
        %v1067 = vadd.f32 %v858, %v1035
        %v1068 = vadd.f32 %v859, %v1038
        %v1069 = vadd.f32 %v860, %v1043
        %v1070 = vadd.f32 %v861, %v1046
        %v1071 = vadd.f32 %v862, %v1051
        %v1072 = vadd.f32 %v863, %v1054
        %1073 = vst [vmem:[#allocation2] sm:$0xff] %v1057
        %1074 = vst [vmem:[#allocation2 + $0x8] sm:$0xff] %v1058
        %1075 = vst [vmem:[#allocation2 + $0x10] sm:$0xff] %v1059
        %1076 = vst [vmem:[#allocation2 + $0x18] sm:$0xff] %v1060
        %1077 = vst [vmem:[#allocation2 + $0x20] sm:$0xff] %v1061
        %1078 = vst [vmem:[#allocation2 + $0x28] sm:$0xff] %v1062
        %1079 = vst [vmem:[#allocation2 + $0x30] sm:$0xff] %v1063
        %1080 = vst [vmem:[#allocation2 + $0x38] sm:$0xff] %v1064
        %1081 = vst [vmem:[#allocation2 + $0x40] sm:$0xff] %v1065
        %1082 = vst [vmem:[#allocation2 + $0x48] sm:$0xff] %v1066
        %1083 = vst [vmem:[#allocation2 + $0x50] sm:$0xff] %v1067
        %1084 = vst [vmem:[#allocation2 + $0x58] sm:$0xff] %v1068
        %1085 = vst [vmem:[#allocation2 + $0x60] sm:$0xff] %v1069
        %1086 = vst [vmem:[#allocation2 + $0x68] sm:$0xff] %v1070
        %1087 = vst [vmem:[#allocation2 + $0x70] sm:$0xff] %v1071
        %1088 = vst [vmem:[#allocation2 + $0x78] sm:$0xff] %v1072
        // Predicated region
        $region69: #{tpu_custom_call.1} parent=43 // pred_check
          %p1089 = pneg %p373
        $region70: #{tpu_custom_call.1} parent=43 // pred_check_branch
          %1091 = sbr.rel (%p1089) target = $region72
        $region71: #{tpu_custom_call.1} parent=43 // pred_region
          %v1092 = vld [vmem:[#allocation3] sm:$0xff]
          %v1093 = vld [vmem:[#allocation3 + $0x8] sm:$0xff]
          %v1094 = vld [vmem:[#allocation3 + $0x10] sm:$0xff]
          %v1095 = vld [vmem:[#allocation3 + $0x18] sm:$0xff]
          %v1096 = vld [vmem:[#allocation3 + $0x20] sm:$0xff]
          %v1097 = vld [vmem:[#allocation3 + $0x28] sm:$0xff]
          %v1098 = vld [vmem:[#allocation3 + $0x30] sm:$0xff]
          %v1099 = vld [vmem:[#allocation3 + $0x38] sm:$0xff]
          %v1100 = vld [vmem:[#allocation3 + $0x40] sm:$0xff]
          %v1101 = vld [vmem:[#allocation3 + $0x48] sm:$0xff]
          %v1102 = vld [vmem:[#allocation3 + $0x50] sm:$0xff]
          %v1103 = vld [vmem:[#allocation3 + $0x58] sm:$0xff]
          %v1104 = vld [vmem:[#allocation3 + $0x60] sm:$0xff]
          %v1105 = vld [vmem:[#allocation3 + $0x68] sm:$0xff]
          %v1106 = vld [vmem:[#allocation3 + $0x70] sm:$0xff]
          %v1107 = vld [vmem:[#allocation3 + $0x78] sm:$0xff]
          %vm1108 = vcmp.gt.f32.partialorder %v1092, 0.0
          %vm1109 = vcmp.gt.f32.partialorder %v1093, 0.0
          %vm1110 = vcmp.gt.f32.partialorder %v1094, 0.0
          %vm1111 = vcmp.gt.f32.partialorder %v1095, 0.0
          %vm1112 = vcmp.gt.f32.partialorder %v1096, 0.0
          %vm1113 = vcmp.gt.f32.partialorder %v1097, 0.0
          %vm1114 = vcmp.gt.f32.partialorder %v1098, 0.0
          %vm1115 = vcmp.gt.f32.partialorder %v1099, 0.0
          %vm1116 = vcmp.gt.f32.partialorder %v1100, 0.0
          %vm1117 = vcmp.gt.f32.partialorder %v1101, 0.0
          %vm1118 = vcmp.gt.f32.partialorder %v1102, 0.0
          %vm1119 = vcmp.gt.f32.partialorder %v1103, 0.0
          %vm1120 = vcmp.gt.f32.partialorder %v1104, 0.0
          %vm1121 = vcmp.gt.f32.partialorder %v1105, 0.0
          %vm1122 = vcmp.gt.f32.partialorder %v1106, 0.0
          %vm1123 = vcmp.gt.f32.partialorder %v1107, 0.0
          %v1124 = vrcp.pop %v1092
          %v1125 = vmul.f32 1.0, %v1124
          %v1126 = vrcp.pop %v1093
          %v1127 = vmul.f32 1.0, %v1126
          %v1128 = vrcp.pop %v1094
          %v1129 = vmul.f32 1.0, %v1128
          %v1130 = vrcp.pop %v1095
          %v1131 = vmul.f32 1.0, %v1130
          %v1132 = vrcp.pop %v1096
          %v1133 = vmul.f32 1.0, %v1132
          %v1134 = vrcp.pop %v1097
          %v1135 = vmul.f32 1.0, %v1134
          %v1136 = vrcp.pop %v1098
          %v1137 = vmul.f32 1.0, %v1136
          %v1138 = vrcp.pop %v1099
          %v1139 = vmul.f32 1.0, %v1138
          %v1140 = vrcp.pop %v1100
          %v1141 = vmul.f32 1.0, %v1140
          %v1142 = vrcp.pop %v1101
          %v1143 = vmul.f32 1.0, %v1142
          %v1144 = vrcp.pop %v1102
          %v1145 = vmul.f32 1.0, %v1144
          %v1146 = vrcp.pop %v1103
          %v1147 = vmul.f32 1.0, %v1146
          %v1148 = vrcp.pop %v1104
          %v1149 = vmul.f32 1.0, %v1148
          %v1150 = vrcp.pop %v1105
          %v1151 = vmul.f32 1.0, %v1150
          %v1152 = vrcp.pop %v1106
          %v1153 = vmul.f32 1.0, %v1152
          %v1154 = vrcp.pop %v1107
          %v1155 = vmul.f32 1.0, %v1154
          %v1156 = vsel %vm1108, %v1125, 0.0
          %v1157 = vsel %vm1109, %v1127, 0.0
          %v1158 = vsel %vm1110, %v1129, 0.0
          %v1159 = vsel %vm1111, %v1131, 0.0
          %v1160 = vsel %vm1112, %v1133, 0.0
          %v1161 = vsel %vm1113, %v1135, 0.0
          %v1162 = vsel %vm1114, %v1137, 0.0
          %v1163 = vsel %vm1115, %v1139, 0.0
          %v1164 = vsel %vm1116, %v1141, 0.0
          %v1165 = vsel %vm1117, %v1143, 0.0
          %v1166 = vsel %vm1118, %v1145, 0.0
          %v1167 = vsel %vm1119, %v1147, 0.0
          %v1168 = vsel %vm1120, %v1149, 0.0
          %v1169 = vsel %vm1121, %v1151, 0.0
          %v1170 = vsel %vm1122, %v1153, 0.0
          %v1171 = vsel %vm1123, %v1155, 0.0
          %v1172 = vld [vmem:[#allocation2] sm:$0xff]
          %v1173 = vld [vmem:[#allocation2 + $0x8] sm:$0xff]
          %v1174 = vld [vmem:[#allocation2 + $0x10] sm:$0xff]
          %v1175 = vld [vmem:[#allocation2 + $0x18] sm:$0xff]
          %v1176 = vld [vmem:[#allocation2 + $0x20] sm:$0xff]
          %v1177 = vld [vmem:[#allocation2 + $0x28] sm:$0xff]
          %v1178 = vld [vmem:[#allocation2 + $0x30] sm:$0xff]
          %v1179 = vld [vmem:[#allocation2 + $0x38] sm:$0xff]
          %v1180 = vld [vmem:[#allocation2 + $0x40] sm:$0xff]
          %v1181 = vld [vmem:[#allocation2 + $0x48] sm:$0xff]
          %v1182 = vld [vmem:[#allocation2 + $0x50] sm:$0xff]
          %v1183 = vld [vmem:[#allocation2 + $0x58] sm:$0xff]
          %v1184 = vld [vmem:[#allocation2 + $0x60] sm:$0xff]
          %v1185 = vld [vmem:[#allocation2 + $0x68] sm:$0xff]
          %v1186 = vld [vmem:[#allocation2 + $0x70] sm:$0xff]
          %v1187 = vld [vmem:[#allocation2 + $0x78] sm:$0xff]
          %1189 = vset.pattern.permute.xlu0 0
          %1190 = vperm.xlu0 %1189, %v1156
          %v1191 = vpop.permute.xlu0 %1190
          %1194 = vset.pattern.permute.xlu0 0
          %1195 = vperm.xlu0 %1194, %v1157
          %v1196 = vpop.permute.xlu0 %1195
          %1199 = vset.pattern.permute.xlu0 0
          %1200 = vperm.xlu0 %1199, %v1158
          %v1201 = vpop.permute.xlu0 %1200
          %1204 = vset.pattern.permute.xlu0 0
          %1205 = vperm.xlu0 %1204, %v1159
          %v1206 = vpop.permute.xlu0 %1205
          %1209 = vset.pattern.permute.xlu0 0
          %1210 = vperm.xlu0 %1209, %v1160
          %v1211 = vpop.permute.xlu0 %1210
          %1214 = vset.pattern.permute.xlu0 0
          %1215 = vperm.xlu0 %1214, %v1161
          %v1216 = vpop.permute.xlu0 %1215
          %1219 = vset.pattern.permute.xlu0 0
          %1220 = vperm.xlu0 %1219, %v1162
          %v1221 = vpop.permute.xlu0 %1220
          %1224 = vset.pattern.permute.xlu0 0
          %1225 = vperm.xlu0 %1224, %v1163
          %v1226 = vpop.permute.xlu0 %1225
          %1229 = vset.pattern.permute.xlu0 0
          %1230 = vperm.xlu0 %1229, %v1164
          %v1231 = vpop.permute.xlu0 %1230
          %1234 = vset.pattern.permute.xlu0 0
          %1235 = vperm.xlu0 %1234, %v1165
          %v1236 = vpop.permute.xlu0 %1235
          %1239 = vset.pattern.permute.xlu0 0
          %1240 = vperm.xlu0 %1239, %v1166
          %v1241 = vpop.permute.xlu0 %1240
          %1244 = vset.pattern.permute.xlu0 0
          %1245 = vperm.xlu0 %1244, %v1167
          %v1246 = vpop.permute.xlu0 %1245
          %1249 = vset.pattern.permute.xlu0 0
          %1250 = vperm.xlu0 %1249, %v1168
          %v1251 = vpop.permute.xlu0 %1250
          %1254 = vset.pattern.permute.xlu0 0
          %1255 = vperm.xlu0 %1254, %v1169
          %v1256 = vpop.permute.xlu0 %1255
          %1259 = vset.pattern.permute.xlu0 0
          %1260 = vperm.xlu0 %1259, %v1170
          %v1261 = vpop.permute.xlu0 %1260
          %1264 = vset.pattern.permute.xlu0 0
          %1265 = vperm.xlu0 %1264, %v1171
          %v1266 = vpop.permute.xlu0 %1265
          %v1268 = vmul.f32 %v1172, %v1191
          %v1269 = vmul.f32 %v1173, %v1196
          %v1270 = vmul.f32 %v1174, %v1201
          %v1271 = vmul.f32 %v1175, %v1206
          %v1272 = vmul.f32 %v1176, %v1211
          %v1273 = vmul.f32 %v1177, %v1216
          %v1274 = vmul.f32 %v1178, %v1221
          %v1275 = vmul.f32 %v1179, %v1226
          %v1276 = vmul.f32 %v1180, %v1231
          %v1277 = vmul.f32 %v1181, %v1236
          %v1278 = vmul.f32 %v1182, %v1241
          %v1279 = vmul.f32 %v1183, %v1246
          %v1280 = vmul.f32 %v1184, %v1251
          %v1281 = vmul.f32 %v1185, %v1256
          %v1282 = vmul.f32 %v1186, %v1261
          %v1283 = vmul.f32 %v1187, %v1266
          %v1284 = vpack.c.bf16 %v1269, %v1268
          %v1285 = vpack.c.bf16 %v1271, %v1270
          %v1286 = vpack.c.bf16 %v1273, %v1272
          %v1287 = vpack.c.bf16 %v1275, %v1274
          %v1288 = vpack.c.bf16 %v1277, %v1276
          %v1289 = vpack.c.bf16 %v1279, %v1278
          %v1290 = vpack.c.bf16 %v1281, %v1280
          %v1291 = vpack.c.bf16 %v1283, %v1282
          %v1292 = vld [vmem:[%s367] sm:$0xff]
          %v1293 = vld [vmem:[%s367 + $0x8] sm:$0xff]
          %v1294 = vld [vmem:[%s367 + $0x10] sm:$0xff]
          %v1295 = vld [vmem:[%s367 + $0x18] sm:$0xff]
          %v1296 = vld [vmem:[%s367 + $0x20] sm:$0xff]
          %v1297 = vld [vmem:[%s367 + $0x28] sm:$0xff]
          %v1298 = vld [vmem:[%s367 + $0x30] sm:$0xff]
          %v1299 = vld [vmem:[%s367 + $0x38] sm:$0xff]
          %v1300 = vld [vmem:[%s367 + $0x40] sm:$0xff]
          %v1301 = vld [vmem:[%s367 + $0x48] sm:$0xff]
          %v1302 = vld [vmem:[%s367 + $0x50] sm:$0xff]
          %v1303 = vld [vmem:[%s367 + $0x58] sm:$0xff]
          %v1304 = vld [vmem:[%s367 + $0x60] sm:$0xff]
          %v1305 = vld [vmem:[%s367 + $0x68] sm:$0xff]
          %v1306 = vld [vmem:[%s367 + $0x70] sm:$0xff]
          %v1307 = vld [vmem:[%s367 + $0x78] sm:$0xff]
          %v1308 = vld [vmem:[#allocation11] sm:$0xf]
          %v1309 = vld [vmem:[#allocation11 + $0x4] sm:$0xf]
          %v1310 = vld [vmem:[#allocation11 + $0x8] sm:$0xf]
          %v1311 = vld [vmem:[#allocation11 + $0xc] sm:$0xf]
          %v1312 = vld [vmem:[#allocation11 + $0x10] sm:$0xf]
          %v1313 = vld [vmem:[#allocation11 + $0x14] sm:$0xf]
          %v1314 = vld [vmem:[#allocation11 + $0x18] sm:$0xf]
          %v1315 = vld [vmem:[#allocation11 + $0x1c] sm:$0xf]
          %v1316 = vld [vmem:[#allocation11 + $0x20] sm:$0xf]
          %v1317 = vld [vmem:[#allocation11 + $0x24] sm:$0xf]
          %v1318 = vld [vmem:[#allocation11 + $0x28] sm:$0xf]
          %v1319 = vld [vmem:[#allocation11 + $0x2c] sm:$0xf]
          %v1320 = vld [vmem:[#allocation11 + $0x30] sm:$0xf]
          %v1321 = vld [vmem:[#allocation11 + $0x34] sm:$0xf]
          %v1322 = vld [vmem:[#allocation11 + $0x38] sm:$0xf]
          %v1323 = vld [vmem:[#allocation11 + $0x3c] sm:$0xf]
          %v1340 = vunpack.c.l.b16 %v1308
          %v1341 = vunpack.c.l.b16 %v1309
          %v1342 = vunpack.c.l.b16 %v1310
          %v1343 = vunpack.c.l.b16 %v1311
          %v1344 = vunpack.c.l.b16 %v1312
          %v1345 = vunpack.c.l.b16 %v1313
          %v1346 = vunpack.c.l.b16 %v1314
          %v1347 = vunpack.c.l.b16 %v1315
          %v1348 = vunpack.c.l.b16 %v1316
          %v1349 = vunpack.c.l.b16 %v1317
          %v1350 = vunpack.c.l.b16 %v1318
          %v1351 = vunpack.c.l.b16 %v1319
          %v1352 = vunpack.c.l.b16 %v1320
          %v1353 = vunpack.c.l.b16 %v1321
          %v1354 = vunpack.c.l.b16 %v1322
          %v1355 = vunpack.c.l.b16 %v1323
          %v1356 = vpack.c.b16 %v1341, %v1340
          %v1357 = vpack.c.b16 %v1343, %v1342
          %v1358 = vpack.c.b16 %v1345, %v1344
          %v1359 = vpack.c.b16 %v1347, %v1346
          %v1360 = vpack.c.b16 %v1349, %v1348
          %v1361 = vpack.c.b16 %v1351, %v1350
          %v1362 = vpack.c.b16 %v1353, %v1352
          %v1363 = vpack.c.b16 %v1355, %v1354
          %1372 = vmatprep.subr.bf16.mxu0 0
          %1373 = vmatpush1.bf16.msra.mxu0 %v1363
          %1374 = vmatprep.subr.bf16.mxu0 0
          %1375 = vmatpush1.bf16.msra.mxu0 %v1362
          %1376 = vmatprep.subr.bf16.mxu0 0
          %1377 = vmatpush1.bf16.msra.mxu0 %v1361
          %1378 = vmatprep.subr.bf16.mxu0 0
          %1379 = vmatpush1.bf16.msra.mxu0 %v1360
          %1380 = vmatprep.subr.bf16.mxu0 0
          %1381 = vmatpush1.bf16.msra.mxu0 %v1359
          %1382 = vmatprep.subr.bf16.mxu0 0
          %1383 = vmatpush1.bf16.msra.mxu0 %v1358
          %1384 = vmatprep.subr.bf16.mxu0 0
          %1385 = vmatpush1.bf16.msra.mxu0 %v1357
          %1386 = vmatprep.subr.bf16.mxu0 0
          %1387 = vmatpush1.bf16.msra.mxu0 %v1356
          %1388 = vmatprep.subr.bf16.mxu0 0
          %1389 = vmatpush2.bf16.msra.mxu0 0
          %1390 = vmatprep.subr.bf16.mxu0 0
          %1391 = vmatpush2.bf16.msra.mxu0 0
          %1392 = vmatprep.subr.bf16.mxu0 0
          %1393 = vmatpush2.bf16.msra.mxu0 0
          %1394 = vmatprep.subr.bf16.mxu0 0
          %1395 = vmatpush2.bf16.msra.mxu0 0
          %1396 = vmatprep.subr.bf16.mxu0 0
          %1397 = vmatpush2.bf16.msra.mxu0 0
          %1398 = vmatprep.subr.bf16.mxu0 0
          %1399 = vmatpush2.bf16.msra.mxu0 0
          %1400 = vmatprep.subr.bf16.mxu0 0
          %1401 = vmatpush2.bf16.msra.mxu0 0
          %1402 = vmatprep.subr.bf16.mxu0 0
          %1403 = vmatpush2.bf16.msra.mxu0 0
          %1404 = vmatprep.mubr.bf16.mxu0 0
          %1405 = vmatmul.mubr.bf16.gmra.mxu0 %v1284
          %v1406 = vpop.f32.mrf.mxu0
          %v1407 = vadd.f32 0.0, %v1406
          %v1408 = vpop.f32.mrf.mxu0
          %v1409 = vpop.f32.mrf.mxu0
          %v1410 = vadd.f32 0.0, %v1409
          %v1411 = vpop.f32.mrf.mxu0
          %1412 = vmatprep.mubr.bf16.mxu0 0
          %1413 = vmatmul.mubr.bf16.gmra.mxu0 %v1285
          %v1414 = vpop.f32.mrf.mxu0
          %v1415 = vadd.f32 0.0, %v1414
          %v1416 = vpop.f32.mrf.mxu0
          %v1417 = vpop.f32.mrf.mxu0
          %v1418 = vadd.f32 0.0, %v1417
          %v1419 = vpop.f32.mrf.mxu0
          %1420 = vmatprep.mubr.bf16.mxu0 0
          %1421 = vmatmul.mubr.bf16.gmra.mxu0 %v1286
          %v1422 = vpop.f32.mrf.mxu0
          %v1423 = vadd.f32 0.0, %v1422
          %v1424 = vpop.f32.mrf.mxu0
          %v1425 = vpop.f32.mrf.mxu0
          %v1426 = vadd.f32 0.0, %v1425
          %v1427 = vpop.f32.mrf.mxu0
          %1428 = vmatprep.mubr.bf16.mxu0 0
          %1429 = vmatmul.mubr.bf16.gmra.mxu0 %v1287
          %v1430 = vpop.f32.mrf.mxu0
          %v1431 = vadd.f32 0.0, %v1430
          %v1432 = vpop.f32.mrf.mxu0
          %v1433 = vpop.f32.mrf.mxu0
          %v1434 = vadd.f32 0.0, %v1433
          %v1435 = vpop.f32.mrf.mxu0
          %1436 = vmatprep.mubr.bf16.mxu0 0
          %1437 = vmatmul.mubr.bf16.gmra.mxu0 %v1288
          %v1438 = vpop.f32.mrf.mxu0
          %v1439 = vadd.f32 0.0, %v1438
          %v1440 = vpop.f32.mrf.mxu0
          %v1441 = vpop.f32.mrf.mxu0
          %v1442 = vadd.f32 0.0, %v1441
          %v1443 = vpop.f32.mrf.mxu0
          %1444 = vmatprep.mubr.bf16.mxu0 0
          %1445 = vmatmul.mubr.bf16.gmra.mxu0 %v1289
          %v1446 = vpop.f32.mrf.mxu0
          %v1447 = vadd.f32 0.0, %v1446
          %v1448 = vpop.f32.mrf.mxu0
          %v1449 = vpop.f32.mrf.mxu0
          %v1450 = vadd.f32 0.0, %v1449
          %v1451 = vpop.f32.mrf.mxu0
          %1452 = vmatprep.mubr.bf16.mxu0 0
          %1453 = vmatmul.mubr.bf16.gmra.mxu0 %v1290
          %v1454 = vpop.f32.mrf.mxu0
          %v1455 = vadd.f32 0.0, %v1454
          %v1456 = vpop.f32.mrf.mxu0
          %v1457 = vpop.f32.mrf.mxu0
          %v1458 = vadd.f32 0.0, %v1457
          %v1459 = vpop.f32.mrf.mxu0
          %1460 = vmatprep.mubr.bf16.mxu0 0
          %1461 = vmatmul.mubr.bf16.gmra.mxu0 %v1291
          %v1462 = vpop.f32.mrf.mxu0
          %v1463 = vadd.f32 0.0, %v1462
          %v1464 = vpop.f32.mrf.mxu0
          %v1465 = vpop.f32.mrf.mxu0
          %v1466 = vadd.f32 0.0, %v1465
          %v1467 = vpop.f32.mrf.mxu0
          %1468 = vdwg.mxu0
          %v1469 = vadd.f32 %v1292, %v1407
          %v1470 = vadd.f32 %v1293, %v1410
          %v1471 = vadd.f32 %v1294, %v1415
          %v1472 = vadd.f32 %v1295, %v1418
          %v1473 = vadd.f32 %v1296, %v1423
          %v1474 = vadd.f32 %v1297, %v1426
          %v1475 = vadd.f32 %v1298, %v1431
          %v1476 = vadd.f32 %v1299, %v1434
          %v1477 = vadd.f32 %v1300, %v1439
          %v1478 = vadd.f32 %v1301, %v1442
          %v1479 = vadd.f32 %v1302, %v1447
          %v1480 = vadd.f32 %v1303, %v1450
          %v1481 = vadd.f32 %v1304, %v1455
          %v1482 = vadd.f32 %v1305, %v1458
          %v1483 = vadd.f32 %v1306, %v1463
          %v1484 = vadd.f32 %v1307, %v1466
          %1485 = vst [vmem:[%s367] sm:$0xff] %v1469
          %1486 = vst [vmem:[%s367 + $0x8] sm:$0xff] %v1470
          %1487 = vst [vmem:[%s367 + $0x10] sm:$0xff] %v1471
          %1488 = vst [vmem:[%s367 + $0x18] sm:$0xff] %v1472
          %1489 = vst [vmem:[%s367 + $0x20] sm:$0xff] %v1473
          %1490 = vst [vmem:[%s367 + $0x28] sm:$0xff] %v1474
          %1491 = vst [vmem:[%s367 + $0x30] sm:$0xff] %v1475
          %1492 = vst [vmem:[%s367 + $0x38] sm:$0xff] %v1476
          %1493 = vst [vmem:[%s367 + $0x40] sm:$0xff] %v1477
          %1494 = vst [vmem:[%s367 + $0x48] sm:$0xff] %v1478
          %1495 = vst [vmem:[%s367 + $0x50] sm:$0xff] %v1479
          %1496 = vst [vmem:[%s367 + $0x58] sm:$0xff] %v1480
          %1497 = vst [vmem:[%s367 + $0x60] sm:$0xff] %v1481
          %1498 = vst [vmem:[%s367 + $0x68] sm:$0xff] %v1482
          %1499 = vst [vmem:[%s367 + $0x70] sm:$0xff] %v1483
          %1500 = vst [vmem:[%s367 + $0x78] sm:$0xff] %v1484
        $region72: #{tpu_custom_call.1} parent=43 // pred_fallthru
          _
        %s1501 = sand.u32 %s183, 1
        %s1502 = scalar_lea.sflag [#allocation6], %s1501
        %s1503 = sand.u32 %s183, 1
        %s1504 = smul.addr %s1503, 128
        %s1505 = scalar_lea.vmem [#allocation13], %s1504
        // Predicated region
        $region73: #{tpu_custom_call.1} parent=43 // pred_check
          %p1506 = pneg %p193
        $region74: #{tpu_custom_call.1} parent=43 // pred_check_branch
          %1508 = sbr.rel (%p1506) target = $region76
        $region75: #{tpu_custom_call.1} parent=43 // pred_region
          %s1509 = smul.u32 16, %s29
          %s1511 = ssub.s32 2048, 2048
          %1512 = vsyncadd %s1502, %s1511
          %s1513 = smul.addr %s1509, 128
          %s1514 = scalar_lea.hbm %s6, %s1513
          %s1515 = sshll.u32 %s1505, 4
          %s1516 = int_to_ptr.vmem [resolvable:$true] %s1515
          %1521 = dma.vmem_to_hbm [thread:$0]  %s1516, 2048, %s1514, %s1502, 128, 128, 8
        $region76: #{tpu_custom_call.1} parent=43 // pred_fallthru
          _
      $region44: #{tpu_custom_call.1} parent=5 // pred_fallthru
        _
      %p1522 = scmp.le.s32.totalorder 2, %s20
      // Predicated region
      $region77: #{tpu_custom_call.1} parent=5 // pred_check
        %p1523 = pneg %p1522
      $region78: #{tpu_custom_call.1} parent=5 // pred_check_branch
        %1525 = sbr.rel (%p1523) target = $region80
      $region79: #{tpu_custom_call.1} parent=5 // pred_region
        %s1526 = ssub.s32 %s20, 2
        // Predicated region
        $region81: #{tpu_custom_call.1} parent=79 // pred_check
          %p1527 = pneg %p199
        $region82: #{tpu_custom_call.1} parent=79 // pred_check_branch
          %1529 = sbr.rel (%p1527) target = $region84
        $region83: #{tpu_custom_call.1} parent=79 // pred_region
          %s1530 = sand.u32 %s184, 1
          %s1531 = scalar_lea.sflag [#allocation6], %s1530
          %s1532 = sand.u32 %s184, 1
          %s1533 = smul.addr %s1532, 128
          %s1534 = scalar_lea.vmem [#allocation13], %s1533
          %1535 = dma.done %s1531, 2048
        $region84: #{tpu_custom_call.1} parent=79 // pred_fallthru
          _
      $region80: #{tpu_custom_call.1} parent=5 // pred_fallthru
        _
    $region6: #{tpu_custom_call.1} parent=1 // loop_footer
      %s24 = sadd.s32 1, %s20
    $region7: #{tpu_custom_call.1} parent=1 // loop_footer_branch
      %19 = sbr.rel target = $region3
    $region8: #{tpu_custom_call.1} parent=1 // loop_exit
      _
    %1536 = vsyncpa [#allocation5], 1
    %s1537 = scalar_lea.sflag [#allocation5], 1
    %1538 = vsyncpa %s1537, 1
    %1539 = vsyncpa [#allocation8], 1
    %1540 = vsyncpa [#allocation12], 1
    %1541 = vsyncpa [#allocation6], 1
    %s1542 = scalar_lea.sflag [#allocation6], 1
    %1543 = vsyncpa %s1542, 1

</llo_original>
